<compile_context>
chip_gen: v7x
topology: tpu7x:2x2x1
jax: 0.10.0
libtpu: 0.0.40
codegen_flags: <defaults>
</compile_context>

<pallas_src>
import math
import functools
import numpy as np
import jax
import jax.numpy as jnp
from jax.experimental import pallas as pl
from jax.experimental.pallas import tpu as pltpu

EPS = 1e-6          # ModelArgs.norm_eps
NEG_INF = -1e30     # finite "-inf": identical softmax result for valid rows,
                    # no NaN if a row is ever fully masked.

# ----------------------------------------------------------------------------
# Per-generation tuning / feature probes
# ----------------------------------------------------------------------------
_VMEM_LIMIT = None
_SINGLE_BUFFER = None


def _vmem_limit_bytes():
    """Physical VMEM capacity minus ~25% headroom for Mosaic internal scratch
    (~48 MiB on v7x, ~96 MiB on v5e/v6e); conservative fallback if unknown."""
    global _VMEM_LIMIT
    if _VMEM_LIMIT is None:
        try:
            cap = int(pltpu.get_tpu_info().vmem_capacity_bytes)
            _VMEM_LIMIT = min((cap * 3) // 4, 100 * 1024 * 1024)
        except Exception:
            _VMEM_LIMIT = 64 * 1024 * 1024
    return _VMEM_LIMIT


def _probe_copy_kernel(x_ref, o_ref):
    o_ref[0] = x_ref[...]


def _single_buffer_supported():
    """Feature-detect BlockSpec(pipeline_mode=pl.Buffered(1)) so grid-invariant
    operands are single- instead of double-buffered (halves their VMEM)."""
    global _SINGLE_BUFFER
    if _SINGLE_BUFFER is not None:
        return _SINGLE_BUFFER
    try:
        x = jnp.arange(8 * 128, dtype=jnp.float32).reshape(8, 128)
        y = pl.pallas_call(
            _probe_copy_kernel,
            out_shape=jax.ShapeDtypeStruct((2, 8, 128), jnp.float32),
            grid=(2,),
            in_specs=[pl.BlockSpec((8, 128), lambda i: (0, 0),
                                   pipeline_mode=pl.Buffered(1))],
            out_specs=pl.BlockSpec((1, 8, 128), lambda i: (i, 0, 0)),
        )(x)
        y = jax.block_until_ready(y)
        _SINGLE_BUFFER = bool(jnp.array_equal(y[0], x)) and bool(jnp.array_equal(y[1], x))
    except Exception:
        _SINGLE_BUFFER = False
    return _SINGLE_BUFFER


def _invariant_spec(shape):
    """BlockSpec for an operand whose block never changes across the grid."""
    index_map = lambda *_: (0,) * len(shape)
    if _single_buffer_supported():
        return pl.BlockSpec(shape, index_map, pipeline_mode=pl.Buffered(1))
    return pl.BlockSpec(shape, index_map)


# ----------------------------------------------------------------------------
# In-kernel helpers
# ----------------------------------------------------------------------------
def _rmsnorm(x, w):
    # x: (S, D) f32, w: (1, D) f32
    ms = jnp.mean(x * x, axis=-1, keepdims=True)
    return x * jax.lax.rsqrt(ms + EPS) * w


def _softmax_last(s):
    m = jnp.max(s, axis=-1, keepdims=True)
    e = jnp.exp(s - m)
    return e * pl.reciprocal(jnp.sum(e, axis=-1, keepdims=True), approx=True)


def _rope(x, cos, sin_signed, even_lane):
    # Interleaved-pair rotation via two XLU lane rolls + one VPU select:
    #   out[2i]   = x[2i]*cos_i   - x[2i+1]*sin_i
    #   out[2i+1] = x[2i+1]*cos_i + x[2i]  *sin_i
    # Sign pre-folded into sin_signed (-sin even lanes, +sin odd lanes): no
    # DxD rotation matrix, no extra MXU FLOPs.
    D = x.shape[-1]
    x_next = pltpu.roll(x, shift=D - 1, axis=1)   # x[j+1]  (wrap never selected)
    x_prev = pltpu.roll(x, shift=1, axis=1)       # x[j-1]  (wrap never selected)
    partner = jnp.where(even_lane, x_next, x_prev)
    return x * cos + partner * sin_signed


# ----------------------------------------------------------------------------
# Fused transformer block kernel
# ----------------------------------------------------------------------------
def _transformer_block_kernel(n_heads, head_dim, apply_final_norm,
                              x_ref, pad_ref, cos_ref, sin_ref,
                              an_w_ref, wqkv_ref, wo_ref,
                              fn_w_ref, w13_ref, w2_ref,
                              *rest):
    if apply_final_norm:
        final_w_ref, out_ref = rest[0], rest[1]
        q_scr, k_scr, v_scr, o_scr = rest[2:]
    else:
        final_w_ref, out_ref = None, rest[0]
        q_scr, k_scr, v_scr, o_scr = rest[1:]

    x = x_ref[0].astype(jnp.float32)   # (S, D) residual widened to f32 in-kernel
    S, D = x.shape
    pad = pad_ref[0]                   # (1, S) additive key-padding mask, f32

    # RoPE tables arrive per-head (S, head_dim); broadcast across heads once.
    cos = jnp.concatenate([cos_ref[...]] * n_heads, axis=-1)          # (S, D)
    sin_signed = jnp.concatenate([sin_ref[...]] * n_heads, axis=-1)   # (S, D)

    # Causal + key-padding additive mask built in-kernel (no (B,S,S) DMA).
    rows = jax.lax.broadcasted_iota(jnp.int32, (S, S), 0)
    cols = jax.lax.broadcasted_iota(jnp.int32, (S, S), 1)
    mask = jnp.where(cols > rows, NEG_INF, 0.0) + pad                 # (S, S)

    even_lane = (jax.lax.broadcasted_iota(jnp.int32, (S, D), 1) % 2) == 0

    # ---- attention branch ----
    xn = _rmsnorm(x, an_w_ref[...])
    qkv = jnp.dot(xn.astype(jnp.bfloat16), wqkv_ref[...],
                  preferred_element_type=jnp.float32)        # (S, 3D), one MXU pass
    # 1/sqrt(head_dim) is pre-folded into the Q columns of wqkv at pack time.
    q = _rope(qkv[:, :D], cos, sin_signed, even_lane)
    k = _rope(qkv[:, D:2 * D], cos, sin_signed, even_lane)
    v = qkv[:, 2 * D:]

    # Stage per-head operands head-major (bf16) so the head loop only does
    # dynamic leading-axis indexing (no dynamic lane slicing), and per-head
    # stores/loads are bf16 (half the vst traffic of f32).
    for h in range(n_heads):
        sl = slice(h * head_dim, (h + 1) * head_dim)
        q_scr[h] = q[:, sl].astype(jnp.bfloat16)
        k_scr[h] = k[:, sl].astype(jnp.bfloat16)
        v_scr[h] = v[:, sl].astype(jnp.bfloat16)

    # fori_loop (not a static Python loop) bounds the live range of the (S,S)
    # scores / softmax intermediates to a single head.
    def head_body(h, carry):
        s = jax.lax.dot_general(q_scr[h], k_scr[h], (((1,), (1,)), ((), ())),
                                preferred_element_type=jnp.float32) + mask
        p = _softmax_last(s)
        o_scr[h] = jnp.dot(p.astype(jnp.bfloat16), v_scr[h],
                           preferred_element_type=jnp.float32).astype(jnp.bfloat16)
        return carry
    jax.lax.fori_loop(0, n_heads, head_body, 0)

    # Re-assemble heads (bf16) and do ONE full-K (S,D)@(D,D) output projection.
    attn_heads = jnp.concatenate([o_scr[h] for h in range(n_heads)], axis=-1)
    attn = jnp.dot(attn_heads, wo_ref[...], preferred_element_type=jnp.float32)
    h1 = x + attn

    # ---- feed-forward branch (SwiGLU), fused w1 || w3 ----
    hn = _rmsnorm(h1, fn_w_ref[...])
    hidden = w2_ref.shape[0]
    gu = jnp.dot(hn.astype(jnp.bfloat16), w13_ref[...],
                 preferred_element_type=jnp.float32)         # (S, 2*hidden)
    g = gu[:, :hidden]
    u = gu[:, hidden:]
    act = (g / (1.0 + jnp.exp(-g))) * u                      # silu(g) * u, f32
    ff = jnp.dot(act.astype(jnp.bfloat16), w2_ref[...],
                 preferred_element_type=jnp.float32)
    y = h1 + ff

    # Final model RMSNorm fused into the last block (no extra HBM round trip).
    if apply_final_norm:
        y = _rmsnorm(y, final_w_ref[...])
    out_ref[0] = y.astype(out_ref.dtype)


def transformer_block(x, pad, cos, sin, params, n_heads, head_dim, final_w=None):
    B, S, D = x.shape
    hd2 = params["w13"].shape[1]      # 2 * hidden
    hidden = params["w2"].shape[0]
    apply_final_norm = final_w is not None
    kern = functools.partial(_transformer_block_kernel,
                             n_heads, head_dim, apply_final_norm)

    in_specs = [
        pl.BlockSpec((1, S, D), lambda b: (b, 0, 0)),    # x (bf16 residual)
        pl.BlockSpec((1, 1, S), lambda b: (b, 0, 0)),    # key-padding row
        _invariant_spec((S, head_dim)),                  # rope cos (per head)
        _invariant_spec((S, head_dim)),                  # rope signed sin
        _invariant_spec((1, D)),                         # attn_norm weight (f32)
        _invariant_spec((D, 3 * D)),                     # wqkv (bf16, q pre-scaled)
        _invariant_spec((D, D)),                         # wo   (bf16)
        _invariant_spec((1, D)),                         # ffn_norm weight (f32)
        _invariant_spec((D, hd2)),                       # w1||w3 (bf16)
        _invariant_spec((hidden, D)),                    # w2   (bf16)
    ]
    args = [x, pad, cos, sin,
            params["attn_norm"], params["wqkv"], params["wo"],
            params["ffn_norm"], params["w13"], params["w2"]]
    if apply_final_norm:
        in_specs.append(_invariant_spec((1, D)))         # final norm weight
        args.append(final_w)

    # Last block emits f32 (post final-norm); earlier blocks carry the residual
    # stream in bf16 to halve activation HBM traffic.
    out_dtype = jnp.float32 if apply_final_norm else jnp.bfloat16

    return pl.pallas_call(
        kern,
        out_shape=jax.ShapeDtypeStruct((B, S, D), out_dtype),
        grid=(B,),
        in_specs=in_specs,
        out_specs=pl.BlockSpec((1, S, D), lambda b: (b, 0, 0)),
        scratch_shapes=[pltpu.VMEM((n_heads, S, head_dim), jnp.bfloat16)
                        for _ in range(4)],              # q / k / v / o (head-major)
        compiler_params=pltpu.CompilerParams(
            dimension_semantics=("parallel",),
            vmem_limit_bytes=_vmem_limit_bytes()),
    )(*args)


# ----------------------------------------------------------------------------
# Host-side packing / glue
# ----------------------------------------------------------------------------
def precompute_rope(head_dim, seqlen, theta=10000.0):
    """Per-head (S, head_dim) tables; sign folded into sin (-sin even, +sin odd)."""
    inv = 1.0 / theta ** (np.arange(0, head_dim, 2)[: head_dim // 2].astype(np.float32) / head_dim)
    t = np.arange(seqlen, dtype=np.float32)
    freqs = np.outer(t, inv)                        # (S, hd/2)
    cos = np.repeat(np.cos(freqs), 2, axis=-1)      # (S, hd)  [c0,c0,c1,c1,...]
    sin = np.repeat(np.sin(freqs), 2, axis=-1)      # (S, hd)  [s0,s0,s1,s1,...]
    sign = np.tile(np.array([-1.0, 1.0], np.float32), head_dim // 2)
    return (jnp.asarray(cos.astype(np.float32)),
            jnp.asarray((sin * sign).astype(np.float32)))


def pack_layer_params(p, head_dim):
    """Fuse QKV (1/sqrt(head_dim) folded into wq) and W1||W3; weights bf16."""
    scale = 1.0 / math.sqrt(head_dim)
    return dict(
        attn_norm=p["attn_norm"],
        ffn_norm=p["ffn_norm"],
        wqkv=jnp.concatenate([p["wq"] * scale, p["wk"], p["wv"]], axis=1).astype(jnp.bfloat16),
        wo=p["wo"].astype(jnp.bfloat16),
        w13=jnp.concatenate([p["w1"], p["w3"]], axis=1).astype(jnp.bfloat16),
        w2=p["w2"].astype(jnp.bfloat16),
    )


def llama2_forward(tokens, emb, packed_layers, final_w, cos, sin, n_heads, head_dim):
    B, S = tokens.shape
    h = emb[tokens].astype(jnp.bfloat16)                      # embedding gather (glue)
    pad = jnp.where(tokens == 0, NEG_INF, 0.0).astype(jnp.float32).reshape(B, 1, S)
    n = len(packed_layers)
    for i, p in enumerate(packed_layers):
        fw = final_w if i == n - 1 else None                  # fuse final norm into last block
        h = transformer_block(h, pad, cos, sin, p, n_heads, head_dim, final_w=fw)
    return h


# ----------------------------------------------------------------------------
# Pure-JAX f32 reference mirroring the PyTorch code path
# ----------------------------------------------------------------------------
def ref_forward(tokens, emb, layer_params, final_w, n_heads, head_dim):
    B, S = tokens.shape
    D = n_heads * head_dim
    h = emb[tokens].astype(jnp.float32)
    inv = 1.0 / (10000.0 ** (jnp.arange(0, head_dim, 2)[: head_dim // 2].astype(jnp.float32) / head_dim))
    freqs = jnp.outer(jnp.arange(S, dtype=jnp.float32), inv)
    fcos = jnp.cos(freqs)[None, :, None, :]
    fsin = jnp.sin(freqs)[None, :, None, :]
    causal = jnp.where(jnp.triu(jnp.ones((S, S), dtype=bool), 1), -jnp.inf, 0.0)
    padm = jnp.where(tokens == 0, -jnp.inf, 0.0)
    mask = causal[None, None] + padm[:, None, None, :]

    def rms(x, w):
        return x * jax.lax.rsqrt(jnp.mean(x * x, -1, keepdims=True) + EPS) * w

    def rope(x):
        xr, xi = x[..., 0::2], x[..., 1::2]
        orr = xr * fcos - xi * fsin
        oi = xr * fsin + xi * fcos
        return jnp.stack([orr, oi], -1).reshape(x.shape)

    for p in layer_params:
        xn = rms(h, p["attn_norm"][0])
        q = (xn @ p["wq"]).reshape(B, S, n_heads, head_dim)
        k = (xn @ p["wk"]).reshape(B, S, n_heads, head_dim)
        v = (xn @ p["wv"]).reshape(B, S, n_heads, head_dim)
        q, k = rope(q), rope(k)
        q, k, v = (a.transpose(0, 2, 1, 3) for a in (q, k, v))
        s = jnp.einsum("bhqd,bhkd->bhqk", q, k) / math.sqrt(head_dim) + mask
        pw = jax.nn.softmax(s, axis=-1)
        o = jnp.einsum("bhqk,bhkd->bhqd", pw, v).transpose(0, 2, 1, 3).reshape(B, S, D)
        h = h + o @ p["wo"]
        hn = rms(h, p["ffn_norm"][0])
        g, u = hn @ p["w1"], hn @ p["w3"]
        h = h + (jax.nn.silu(g) * u) @ p["w2"]
    return rms(h, final_w[0])


if __name__ == "__main__":
    # ModelArgs-consistent toy config (dim=128 is the module default, lane-aligned).
    B, S = 2, 8
    VOCAB = 128
    N_LAYERS = 2
    N_HEADS = 4
    D = 128
    HEAD_DIM = D // N_HEADS
    HIDDEN = 4 * D          # Llama2P sets hidden_dim = n_embd * 4

    key = jax.random.PRNGKey(0)
    k_tok, k_emb, kp = jax.random.split(key, 3)
    # tokens >= 1 so no row is fully padded (padding id is 0 in Llama2P)
    tokens = jax.random.randint(k_tok, (B, S), 1, VOCAB)
    emb = (0.02 * jax.random.normal(k_emb, (VOCAB, D))).astype(jnp.float32)

    layer_params = []
    for _ in range(N_LAYERS):
        kp, *ks = jax.random.split(kp, 8)
        layer_params.append(dict(
            attn_norm=jnp.ones((1, D), jnp.float32),
            ffn_norm=jnp.ones((1, D), jnp.float32),
            wq=(0.02 * jax.random.normal(ks[0], (D, D))).astype(jnp.float32),
            wk=(0.02 * jax.random.normal(ks[1], (D, D))).astype(jnp.float32),
            wv=(0.02 * jax.random.normal(ks[2], (D, D))).astype(jnp.float32),
            wo=(0.02 * jax.random.normal(ks[3], (D, D))).astype(jnp.float32),
            w1=(0.02 * jax.random.normal(ks[4], (D, HIDDEN))).astype(jnp.float32),
            w2=(0.02 * jax.random.normal(ks[5], (HIDDEN, D))).astype(jnp.float32),
            w3=(0.02 * jax.random.normal(ks[6], (D, HIDDEN))).astype(jnp.float32),
        ))
    final_w = jnp.ones((1, D), jnp.float32)

    packed_layers = [pack_layer_params(p, HEAD_DIM) for p in layer_params]
    cos_hd, sin_hd = precompute_rope(HEAD_DIM, S)

    out = llama2_forward(tokens, emb, packed_layers, final_w, cos_hd, sin_hd,
                         N_HEADS, HEAD_DIM)
    out = jax.block_until_ready(out)

    ref = ref_forward(tokens, emb, layer_params, final_w, N_HEADS, HEAD_DIM)
    assert out.shape == (B, S, D)
    err = float(np.max(np.abs(np.asarray(out) - np.asarray(ref))))
    # bf16 matmul operands + bf16 inter-layer residual vs f32 reference
    assert np.allclose(np.asarray(out), np.asarray(ref), atol=5e-2, rtol=5e-2), err
    print("KERNEL_OK")
</pallas_src>

<mosaic_0001>
module attributes {stable_mosaic.version = 11 : i64} {
  func.func @_probe_copy_kernel(%arg0: i32, %arg1: memref<8x128xf32, #tpu.memory_space<vmem>>, %arg2: memref<1x8x128xf32, #tpu.memory_space<vmem>>) attributes {dimension_semantics = [#tpu.dimension_semantics<arbitrary>], iteration_bounds = array<i64: 2>, scalar_prefetch = 0 : i64, scratch_operands = 0 : i64, tpu.core_type = #tpu.core_type<tc>, window_params = [{pipeline_mode = #tpu.pipeline_mode<synchronous>, transform_indices = @transform_0, window_bounds = array<i64: 8, 128>}, {transform_indices = @transform_1, window_bounds = array<i64: 1, 8, 128>}]} {
    %c0 = arith.constant 0 : index
    %c0_0 = arith.constant 0 : index
    %0 = vector.load %arg1[%c0, %c0_0] : memref<8x128xf32, #tpu.memory_space<vmem>>, vector<8x128xf32>
    %c0_1 = arith.constant 0 : index
    %c0_2 = arith.constant 0 : index
    %c0_3 = arith.constant 0 : index
    %1 = vector.load %arg2[%c0_1, %c0_2, %c0_3] : memref<1x8x128xf32, #tpu.memory_space<vmem>>, vector<1x8x128xf32>
    %2 = vector.shape_cast %1 : vector<1x8x128xf32> to vector<8x128xf32>
    %3 = vector.shape_cast %0 : vector<8x128xf32> to vector<1x8x128xf32>
    tpu.vector_store %arg2[%c0_1, %c0_2, %c0_3], %3 {strides = array<i32>} : memref<1x8x128xf32, #tpu.memory_space<vmem>>, vector<1x8x128xf32>,
    return
  }
  func.func @transform_0(%arg0: i32) -> (i32, i32) {
    %c0_i32 = arith.constant 0 : i32
    %c0_i32_0 = arith.constant 0 : i32
    %c0_i32_1 = arith.constant 0 : i32
    return %c0_i32, %c0_i32_0 : i32, i32
  }
  func.func @transform_1(%arg0: i32) -> (i32, i32, i32) {
    %c0_i32 = arith.constant 0 : i32
    %c0_i32_0 = arith.constant 0 : i32
    %c0_i32_1 = arith.constant 0 : i32
    return %arg0, %c0_i32, %c0_i32_0 : i32, i32, i32
  }
}

module attributes {stable_mosaic.version = 11 : i64} {
  func.func @_transformer_block_kernel(%arg0: i32, %arg1: memref<1x8x128xbf16, #tpu.memory_space<vmem>>, %arg2: memref<1x1x8xf32, #tpu.memory_space<vmem>>, %arg3: memref<8x32xf32, #tpu.memory_space<vmem>>, %arg4: memref<8x32xf32, #tpu.memory_space<vmem>>, %arg5: memref<1x128xf32, #tpu.memory_space<vmem>>, %arg6: memref<128x384xbf16, #tpu.memory_space<vmem>>, %arg7: memref<128x128xbf16, #tpu.memory_space<vmem>>, %arg8: memref<1x128xf32, #tpu.memory_space<vmem>>, %arg9: memref<128x1024xbf16, #tpu.memory_space<vmem>>, %arg10: memref<512x128xbf16, #tpu.memory_space<vmem>>, %arg11: memref<1x8x128xbf16, #tpu.memory_space<vmem>>, %arg12: memref<4x8x32xbf16, #tpu.memory_space<vmem>>, %arg13: memref<4x8x32xbf16, #tpu.memory_space<vmem>>, %arg14: memref<4x8x32xbf16, #tpu.memory_space<vmem>>, %arg15: memref<4x8x32xbf16, #tpu.memory_space<vmem>>) attributes {dimension_semantics = [#tpu.dimension_semantics<parallel>], iteration_bounds = array<i64: 2>, scalar_prefetch = 0 : i64, scratch_operands = 4 : i64, tpu.core_type = #tpu.core_type<tc>, window_params = [{transform_indices = @transform_0, window_bounds = array<i64: 1, 8, 128>}, {transform_indices = @transform_1, window_bounds = array<i64: 1, 1, 8>}, {pipeline_mode = #tpu.pipeline_mode<synchronous>, transform_indices = @transform_2, window_bounds = array<i64: 8, 32>}, {pipeline_mode = #tpu.pipeline_mode<synchronous>, transform_indices = @transform_3, window_bounds = array<i64: 8, 32>}, {pipeline_mode = #tpu.pipeline_mode<synchronous>, transform_indices = @transform_4, window_bounds = array<i64: 1, 128>}, {pipeline_mode = #tpu.pipeline_mode<synchronous>, transform_indices = @transform_5, window_bounds = array<i64: 128, 384>}, {pipeline_mode = #tpu.pipeline_mode<synchronous>, transform_indices = @transform_6, window_bounds = array<i64: 128, 128>}, {pipeline_mode = #tpu.pipeline_mode<synchronous>, transform_indices = @transform_7, window_bounds = array<i64: 1, 128>}, {pipeline_mode = #tpu.pipeline_mode<synchronous>, transform_indices = @transform_8, window_bounds = array<i64: 128, 1024>}, {pipeline_mode = #tpu.pipeline_mode<synchronous>, transform_indices = @transform_9, window_bounds = array<i64: 512, 128>}, {transform_indices = @transform_10, window_bounds = array<i64: 1, 8, 128>}]} {
    %c0 = arith.constant 0 : index
    %c0_0 = arith.constant 0 : index
    %c0_1 = arith.constant 0 : index
    %0 = vector.load %arg1[%c0, %c0_0, %c0_1] : memref<1x8x128xbf16, #tpu.memory_space<vmem>>, vector<1x8x128xbf16>
    %1 = vector.shape_cast %0 : vector<1x8x128xbf16> to vector<8x128xbf16>
    %2 = arith.extf %1 : vector<8x128xbf16> to vector<8x128xf32>
    %c0_2 = arith.constant 0 : index
    %c0_3 = arith.constant 0 : index
    %c0_4 = arith.constant 0 : index
    %3 = vector.load %arg2[%c0_2, %c0_3, %c0_4] : memref<1x1x8xf32, #tpu.memory_space<vmem>>, vector<1x1x8xf32>
    %4 = vector.shape_cast %3 : vector<1x1x8xf32> to vector<1x8xf32>
    %c0_5 = arith.constant 0 : index
    %c0_6 = arith.constant 0 : index
    %5 = vector.load %arg3[%c0_5, %c0_6] : memref<8x32xf32, #tpu.memory_space<vmem>>, vector<8x32xf32>
    %6 = tpu.concatenate %5, %5, %5, %5 in 1 : vector<8x32xf32>, vector<8x32xf32>, vector<8x32xf32>, vector<8x32xf32> -> vector<8x128xf32>
    %c0_7 = arith.constant 0 : index
    %c0_8 = arith.constant 0 : index
    %7 = vector.load %arg4[%c0_7, %c0_8] : memref<8x32xf32, #tpu.memory_space<vmem>>, vector<8x32xf32>
    %8 = tpu.concatenate %7, %7, %7, %7 in 1 : vector<8x32xf32>, vector<8x32xf32>, vector<8x32xf32>, vector<8x32xf32> -> vector<8x128xf32>
    %9 = tpu.iota {dimensions = array<i32: 0>} : vector<8x8xi32>
    %10 = tpu.iota {dimensions = array<i32: 1>} : vector<8x8xi32>
    %11 = arith.cmpi sgt, %10, %9 : vector<8x8xi32>
    %cst = arith.constant -1.000000e+30 : f32
    %cst_9 = arith.constant 0.000000e+00 : f32
    %12 = vector.broadcast %cst : f32 to vector<8x8xf32>
    %13 = vector.broadcast %cst_9 : f32 to vector<8x8xf32>
    %14 = arith.select %11, %12, %13 : vector<8x8xi1>, vector<8x8xf32>
    %15 = vector.broadcast %4 : vector<1x8xf32> to vector<8x8xf32>
    %16 = arith.addf %14, %15 : vector<8x8xf32>
    %17 = tpu.iota {dimensions = array<i32: 1>} : vector<8x128xi32>
    %c2_i32 = arith.constant 2 : i32
    %c0_i32 = arith.constant 0 : i32
    %18 = arith.cmpi eq, %c2_i32, %c0_i32 : i32
    %c1_i32 = arith.constant 1 : i32
    %19 = arith.select %18, %c1_i32, %c2_i32 : i32
    %20 = vector.broadcast %19 : i32 to vector<8x128xi32>
    %21 = arith.remsi %17, %20 : vector<8x128xi32>
    %c0_i32_10 = arith.constant 0 : i32
    %22 = vector.broadcast %c0_i32_10 : i32 to vector<8x128xi32>
    %23 = arith.cmpi ne, %21, %22 : vector<8x128xi32>
    %c0_i32_11 = arith.constant 0 : i32
    %24 = vector.broadcast %c0_i32_11 : i32 to vector<8x128xi32>
    %25 = arith.cmpi slt, %21, %24 : vector<8x128xi32>
    %c0_i32_12 = arith.constant 0 : i32
    %26 = arith.cmpi slt, %19, %c0_i32_12 : i32
    %27 = vector.broadcast %26 : i1 to vector<8x128xi1>
    %28 = vector.broadcast %27 : vector<8x128xi1> to vector<8x128xi1>
    %29 = arith.xori %25, %28 : vector<8x128xi1>
    %30 = arith.andi %29, %23 : vector<8x128xi1>
    %31 = vector.broadcast %19 : i32 to vector<8x128xi32>
    %32 = arith.addi %21, %31 : vector<8x128xi32>
    %33 = arith.select %30, %32, %21 : vector<8x128xi1>, vector<8x128xi32>
    %c0_i32_13 = arith.constant 0 : i32
    %34 = vector.broadcast %c0_i32_13 : i32 to vector<8x128xi32>
    %35 = arith.cmpi eq, %33, %34 : vector<8x128xi32>
    %c0_14 = arith.constant 0 : index
    %c0_15 = arith.constant 0 : index
    %36 = vector.load %arg5[%c0_14, %c0_15] : memref<1x128xf32, #tpu.memory_space<vmem>>, vector<1x128xf32>
    %37 = arith.mulf %2, %2 : vector<8x128xf32>
    %cst_16 = arith.constant dense<0.000000e+00> : vector<8xf32>
    %38 = vector.multi_reduction <add>, %37, %cst_16 [1] : vector<8x128xf32> to vector<8xf32>
    %39 = vector.shape_cast %38 : vector<8xf32> to vector<8x1xf32>
    %cst_17 = arith.constant 1.280000e+02 : f32
    %40 = vector.broadcast %cst_17 : f32 to vector<8x1xf32>
    %41 = arith.divf %39, %40 : vector<8x1xf32>
    %cst_18 = arith.constant 9.99999997E-7 : f32
    %42 = vector.broadcast %cst_18 : f32 to vector<8x1xf32>
    %43 = arith.addf %41, %42 : vector<8x1xf32>
    %44 = math.rsqrt %43 : vector<8x1xf32>
    %45 = vector.broadcast %44 : vector<8x1xf32> to vector<8x128xf32>
    %46 = arith.mulf %2, %45 : vector<8x128xf32>
    %47 = vector.broadcast %36 : vector<1x128xf32> to vector<8x128xf32>
    %48 = arith.mulf %46, %47 : vector<8x128xf32>
    %49 = arith.truncf %48 : vector<8x128xf32> to vector<8x128xbf16>
    %c0_19 = arith.constant 0 : index
    %c0_20 = arith.constant 0 : index
    %50 = vector.load %arg6[%c0_19, %c0_20] : memref<128x384xbf16, #tpu.memory_space<vmem>>, vector<128x384xbf16>
    %cst_21 = arith.constant dense<0.000000e+00> : vector<8x384xf32>
    %51 = tpu.matmul %49, %50, %cst_21 {dimension_numbers = #tpu.dot_dimension_numbers<[1], [0], [0], [1], [0, 0, 1, 1], [], []>} : vector<8x128xbf16>, vector<128x384xbf16>, vector<8x384xf32> -> vector<8x384xf32>
    %52 = vector.extract_strided_slice %51 {offsets = [0, 0], sizes = [8, 128], strides = [1, 1]} : vector<8x384xf32> to vector<8x128xf32>
    %c127_i32 = arith.constant 127 : i32
    %53 = tpu.dynamic_rotate %52 by %c127_i32 dim 1 : vector<8x128xf32>, i32 -> vector<8x128xf32>
    %c1_i32_22 = arith.constant 1 : i32
    %54 = tpu.dynamic_rotate %52 by %c1_i32_22 dim 1 : vector<8x128xf32>, i32 -> vector<8x128xf32>
    %55 = arith.select %35, %53, %54 : vector<8x128xi1>, vector<8x128xf32>
    %56 = arith.mulf %52, %6 : vector<8x128xf32>
    %57 = arith.mulf %55, %8 : vector<8x128xf32>
    %58 = arith.addf %56, %57 : vector<8x128xf32>
    %59 = vector.extract_strided_slice %51 {offsets = [0, 128], sizes = [8, 128], strides = [1, 1]} : vector<8x384xf32> to vector<8x128xf32>
    %c127_i32_23 = arith.constant 127 : i32
    %60 = tpu.dynamic_rotate %59 by %c127_i32_23 dim 1 : vector<8x128xf32>, i32 -> vector<8x128xf32>
    %c1_i32_24 = arith.constant 1 : i32
    %61 = tpu.dynamic_rotate %59 by %c1_i32_24 dim 1 : vector<8x128xf32>, i32 -> vector<8x128xf32>
    %62 = arith.select %35, %60, %61 : vector<8x128xi1>, vector<8x128xf32>
    %63 = arith.mulf %59, %6 : vector<8x128xf32>
    %64 = arith.mulf %62, %8 : vector<8x128xf32>
    %65 = arith.addf %63, %64 : vector<8x128xf32>
    %66 = vector.extract_strided_slice %51 {offsets = [0, 256], sizes = [8, 128], strides = [1, 1]} : vector<8x384xf32> to vector<8x128xf32>
    %67 = vector.extract_strided_slice %58 {offsets = [0, 0], sizes = [8, 32], strides = [1, 1]} : vector<8x128xf32> to vector<8x32xf32>
    %68 = arith.truncf %67 : vector<8x32xf32> to vector<8x32xbf16>
    %c0_25 = arith.constant 0 : index
    %c0_26 = arith.constant 0 : index
    %c0_27 = arith.constant 0 : index
    %69 = vector.load %arg12[%c0_25, %c0_26, %c0_27] : memref<4x8x32xbf16, #tpu.memory_space<vmem>>, vector<1x8x32xbf16>
    %70 = vector.shape_cast %69 : vector<1x8x32xbf16> to vector<8x32xbf16>
    %71 = vector.shape_cast %68 : vector<8x32xbf16> to vector<1x8x32xbf16>
    tpu.vector_store %arg12[%c0_25, %c0_26, %c0_27], %71 {strides = array<i32>} : memref<4x8x32xbf16, #tpu.memory_space<vmem>>, vector<1x8x32xbf16>,
    %72 = vector.extract_strided_slice %65 {offsets = [0, 0], sizes = [8, 32], strides = [1, 1]} : vector<8x128xf32> to vector<8x32xf32>
    %73 = arith.truncf %72 : vector<8x32xf32> to vector<8x32xbf16>
    %c0_28 = arith.constant 0 : index
    %c0_29 = arith.constant 0 : index
    %c0_30 = arith.constant 0 : index
    %74 = vector.load %arg13[%c0_28, %c0_29, %c0_30] : memref<4x8x32xbf16, #tpu.memory_space<vmem>>, vector<1x8x32xbf16>
    %75 = vector.shape_cast %74 : vector<1x8x32xbf16> to vector<8x32xbf16>
    %76 = vector.shape_cast %73 : vector<8x32xbf16> to vector<1x8x32xbf16>
    tpu.vector_store %arg13[%c0_28, %c0_29, %c0_30], %76 {strides = array<i32>} : memref<4x8x32xbf16, #tpu.memory_space<vmem>>, vector<1x8x32xbf16>,
    %77 = vector.extract_strided_slice %66 {offsets = [0, 0], sizes = [8, 32], strides = [1, 1]} : vector<8x128xf32> to vector<8x32xf32>
    %78 = arith.truncf %77 : vector<8x32xf32> to vector<8x32xbf16>
    %c0_31 = arith.constant 0 : index
    %c0_32 = arith.constant 0 : index
    %c0_33 = arith.constant 0 : index
    %79 = vector.load %arg14[%c0_31, %c0_32, %c0_33] : memref<4x8x32xbf16, #tpu.memory_space<vmem>>, vector<1x8x32xbf16>
    %80 = vector.shape_cast %79 : vector<1x8x32xbf16> to vector<8x32xbf16>
    %81 = vector.shape_cast %78 : vector<8x32xbf16> to vector<1x8x32xbf16>
    tpu.vector_store %arg14[%c0_31, %c0_32, %c0_33], %81 {strides = array<i32>} : memref<4x8x32xbf16, #tpu.memory_space<vmem>>, vector<1x8x32xbf16>,
    %82 = vector.extract_strided_slice %58 {offsets = [0, 32], sizes = [8, 32], strides = [1, 1]} : vector<8x128xf32> to vector<8x32xf32>
    %83 = arith.truncf %82 : vector<8x32xf32> to vector<8x32xbf16>
    %c1 = arith.constant 1 : index
    %c0_34 = arith.constant 0 : index
    %c0_35 = arith.constant 0 : index
    %84 = vector.load %arg12[%c1, %c0_34, %c0_35] : memref<4x8x32xbf16, #tpu.memory_space<vmem>>, vector<1x8x32xbf16>
    %85 = vector.shape_cast %84 : vector<1x8x32xbf16> to vector<8x32xbf16>
    %86 = vector.shape_cast %83 : vector<8x32xbf16> to vector<1x8x32xbf16>
    tpu.vector_store %arg12[%c1, %c0_34, %c0_35], %86 {strides = array<i32>} : memref<4x8x32xbf16, #tpu.memory_space<vmem>>, vector<1x8x32xbf16>,
    %87 = vector.extract_strided_slice %65 {offsets = [0, 32], sizes = [8, 32], strides = [1, 1]} : vector<8x128xf32> to vector<8x32xf32>
    %88 = arith.truncf %87 : vector<8x32xf32> to vector<8x32xbf16>
    %c1_36 = arith.constant 1 : index
    %c0_37 = arith.constant 0 : index
    %c0_38 = arith.constant 0 : index
    %89 = vector.load %arg13[%c1_36, %c0_37, %c0_38] : memref<4x8x32xbf16, #tpu.memory_space<vmem>>, vector<1x8x32xbf16>
    %90 = vector.shape_cast %89 : vector<1x8x32xbf16> to vector<8x32xbf16>
    %91 = vector.shape_cast %88 : vector<8x32xbf16> to vector<1x8x32xbf16>
    tpu.vector_store %arg13[%c1_36, %c0_37, %c0_38], %91 {strides = array<i32>} : memref<4x8x32xbf16, #tpu.memory_space<vmem>>, vector<1x8x32xbf16>,
    %92 = vector.extract_strided_slice %66 {offsets = [0, 32], sizes = [8, 32], strides = [1, 1]} : vector<8x128xf32> to vector<8x32xf32>
    %93 = arith.truncf %92 : vector<8x32xf32> to vector<8x32xbf16>
    %c1_39 = arith.constant 1 : index
    %c0_40 = arith.constant 0 : index
    %c0_41 = arith.constant 0 : index
    %94 = vector.load %arg14[%c1_39, %c0_40, %c0_41] : memref<4x8x32xbf16, #tpu.memory_space<vmem>>, vector<1x8x32xbf16>
    %95 = vector.shape_cast %94 : vector<1x8x32xbf16> to vector<8x32xbf16>
    %96 = vector.shape_cast %93 : vector<8x32xbf16> to vector<1x8x32xbf16>
    tpu.vector_store %arg14[%c1_39, %c0_40, %c0_41], %96 {strides = array<i32>} : memref<4x8x32xbf16, #tpu.memory_space<vmem>>, vector<1x8x32xbf16>,
    %97 = vector.extract_strided_slice %58 {offsets = [0, 64], sizes = [8, 32], strides = [1, 1]} : vector<8x128xf32> to vector<8x32xf32>
    %98 = arith.truncf %97 : vector<8x32xf32> to vector<8x32xbf16>
    %c2 = arith.constant 2 : index
    %c0_42 = arith.constant 0 : index
    %c0_43 = arith.constant 0 : index
    %99 = vector.load %arg12[%c2, %c0_42, %c0_43] : memref<4x8x32xbf16, #tpu.memory_space<vmem>>, vector<1x8x32xbf16>
    %100 = vector.shape_cast %99 : vector<1x8x32xbf16> to vector<8x32xbf16>
    %101 = vector.shape_cast %98 : vector<8x32xbf16> to vector<1x8x32xbf16>
    tpu.vector_store %arg12[%c2, %c0_42, %c0_43], %101 {strides = array<i32>} : memref<4x8x32xbf16, #tpu.memory_space<vmem>>, vector<1x8x32xbf16>,
    %102 = vector.extract_strided_slice %65 {offsets = [0, 64], sizes = [8, 32], strides = [1, 1]} : vector<8x128xf32> to vector<8x32xf32>
    %103 = arith.truncf %102 : vector<8x32xf32> to vector<8x32xbf16>
    %c2_44 = arith.constant 2 : index
    %c0_45 = arith.constant 0 : index
    %c0_46 = arith.constant 0 : index
    %104 = vector.load %arg13[%c2_44, %c0_45, %c0_46] : memref<4x8x32xbf16, #tpu.memory_space<vmem>>, vector<1x8x32xbf16>
    %105 = vector.shape_cast %104 : vector<1x8x32xbf16> to vector<8x32xbf16>
    %106 = vector.shape_cast %103 : vector<8x32xbf16> to vector<1x8x32xbf16>
    tpu.vector_store %arg13[%c2_44, %c0_45, %c0_46], %106 {strides = array<i32>} : memref<4x8x32xbf16, #tpu.memory_space<vmem>>, vector<1x8x32xbf16>,
    %107 = vector.extract_strided_slice %66 {offsets = [0, 64], sizes = [8, 32], strides = [1, 1]} : vector<8x128xf32> to vector<8x32xf32>
    %108 = arith.truncf %107 : vector<8x32xf32> to vector<8x32xbf16>
    %c2_47 = arith.constant 2 : index
    %c0_48 = arith.constant 0 : index
    %c0_49 = arith.constant 0 : index
    %109 = vector.load %arg14[%c2_47, %c0_48, %c0_49] : memref<4x8x32xbf16, #tpu.memory_space<vmem>>, vector<1x8x32xbf16>
    %110 = vector.shape_cast %109 : vector<1x8x32xbf16> to vector<8x32xbf16>
    %111 = vector.shape_cast %108 : vector<8x32xbf16> to vector<1x8x32xbf16>
    tpu.vector_store %arg14[%c2_47, %c0_48, %c0_49], %111 {strides = array<i32>} : memref<4x8x32xbf16, #tpu.memory_space<vmem>>, vector<1x8x32xbf16>,
    %112 = vector.extract_strided_slice %58 {offsets = [0, 96], sizes = [8, 32], strides = [1, 1]} : vector<8x128xf32> to vector<8x32xf32>
    %113 = arith.truncf %112 : vector<8x32xf32> to vector<8x32xbf16>
    %c3 = arith.constant 3 : index
    %c0_50 = arith.constant 0 : index
    %c0_51 = arith.constant 0 : index
    %114 = vector.load %arg12[%c3, %c0_50, %c0_51] : memref<4x8x32xbf16, #tpu.memory_space<vmem>>, vector<1x8x32xbf16>
    %115 = vector.shape_cast %114 : vector<1x8x32xbf16> to vector<8x32xbf16>
    %116 = vector.shape_cast %113 : vector<8x32xbf16> to vector<1x8x32xbf16>
    tpu.vector_store %arg12[%c3, %c0_50, %c0_51], %116 {strides = array<i32>} : memref<4x8x32xbf16, #tpu.memory_space<vmem>>, vector<1x8x32xbf16>,
    %117 = vector.extract_strided_slice %65 {offsets = [0, 96], sizes = [8, 32], strides = [1, 1]} : vector<8x128xf32> to vector<8x32xf32>
    %118 = arith.truncf %117 : vector<8x32xf32> to vector<8x32xbf16>
    %c3_52 = arith.constant 3 : index
    %c0_53 = arith.constant 0 : index
    %c0_54 = arith.constant 0 : index
    %119 = vector.load %arg13[%c3_52, %c0_53, %c0_54] : memref<4x8x32xbf16, #tpu.memory_space<vmem>>, vector<1x8x32xbf16>
    %120 = vector.shape_cast %119 : vector<1x8x32xbf16> to vector<8x32xbf16>
    %121 = vector.shape_cast %118 : vector<8x32xbf16> to vector<1x8x32xbf16>
    tpu.vector_store %arg13[%c3_52, %c0_53, %c0_54], %121 {strides = array<i32>} : memref<4x8x32xbf16, #tpu.memory_space<vmem>>, vector<1x8x32xbf16>,
    %122 = vector.extract_strided_slice %66 {offsets = [0, 96], sizes = [8, 32], strides = [1, 1]} : vector<8x128xf32> to vector<8x32xf32>
    %123 = arith.truncf %122 : vector<8x32xf32> to vector<8x32xbf16>
    %c3_55 = arith.constant 3 : index
    %c0_56 = arith.constant 0 : index
    %c0_57 = arith.constant 0 : index
    %124 = vector.load %arg14[%c3_55, %c0_56, %c0_57] : memref<4x8x32xbf16, #tpu.memory_space<vmem>>, vector<1x8x32xbf16>
    %125 = vector.shape_cast %124 : vector<1x8x32xbf16> to vector<8x32xbf16>
    %126 = vector.shape_cast %123 : vector<8x32xbf16> to vector<1x8x32xbf16>
    tpu.vector_store %arg14[%c3_55, %c0_56, %c0_57], %126 {strides = array<i32>} : memref<4x8x32xbf16, #tpu.memory_space<vmem>>, vector<1x8x32xbf16>,
    %c0_i32_58 = arith.constant 0 : i32
    %c4_i32 = arith.constant 4 : i32
    %127 = arith.addi %c0_i32_58, %c4_i32 : i32
    %c1_i32_59 = arith.constant 1 : i32
    scf.for %arg16 = %c0_i32_58 to %127 step %c1_i32_59  : i32 {
      %173 = arith.index_cast %arg16 : i32 to index
      %c0_92 = arith.constant 0 : index
      %c0_93 = arith.constant 0 : index
      %174 = vector.load %arg12[%173, %c0_92, %c0_93] : memref<4x8x32xbf16, #tpu.memory_space<vmem>>, vector<1x8x32xbf16>
      %175 = vector.shape_cast %174 : vector<1x8x32xbf16> to vector<8x32xbf16>
      %176 = arith.index_cast %arg16 : i32 to index
      %c0_94 = arith.constant 0 : index
      %c0_95 = arith.constant 0 : index
      %177 = vector.load %arg13[%176, %c0_94, %c0_95] : memref<4x8x32xbf16, #tpu.memory_space<vmem>>, vector<1x8x32xbf16>
      %178 = vector.shape_cast %177 : vector<1x8x32xbf16> to vector<8x32xbf16>
      %cst_96 = arith.constant dense<0.000000e+00> : vector<8x8xf32>
      %179 = tpu.matmul %175, %178, %cst_96 {dimension_numbers = #tpu.dot_dimension_numbers<[1], [1], [0], [0], [0, 0, 1, 0], [], []>} : vector<8x32xbf16>, vector<8x32xbf16>, vector<8x8xf32> -> vector<8x8xf32>
      %180 = arith.addf %179, %16 : vector<8x8xf32>
      %cst_97 = arith.constant dense<0xFF800000> : vector<8xf32>
      %181 = vector.multi_reduction <maximumf>, %180, %cst_97 [1] : vector<8x8xf32> to vector<8xf32>
      %182 = vector.shape_cast %181 : vector<8xf32> to vector<8x1xf32>
      %183 = vector.broadcast %182 : vector<8x1xf32> to vector<8x8xf32>
      %184 = arith.subf %180, %183 : vector<8x8xf32>
      %185 = math.exp %184 : vector<8x8xf32>
      %cst_98 = arith.constant dense<0.000000e+00> : vector<8xf32>
      %186 = vector.multi_reduction <add>, %185, %cst_98 [1] : vector<8x8xf32> to vector<8xf32>
      %187 = vector.shape_cast %186 : vector<8xf32> to vector<8x1xf32>
      %188 = tpu.reciprocal %187 {approx = true} : vector<8x1xf32> -> vector<8x1xf32>
      %189 = vector.broadcast %188 : vector<8x1xf32> to vector<8x8xf32>
      %190 = arith.mulf %185, %189 : vector<8x8xf32>
      %191 = arith.truncf %190 : vector<8x8xf32> to vector<8x8xbf16>
      %192 = arith.index_cast %arg16 : i32 to index
      %c0_99 = arith.constant 0 : index
      %c0_100 = arith.constant 0 : index
      %193 = vector.load %arg14[%192, %c0_99, %c0_100] : memref<4x8x32xbf16, #tpu.memory_space<vmem>>, vector<1x8x32xbf16>
      %194 = vector.shape_cast %193 : vector<1x8x32xbf16> to vector<8x32xbf16>
      %cst_101 = arith.constant dense<0.000000e+00> : vector<8x32xf32>
      %195 = tpu.matmul %191, %194, %cst_101 {dimension_numbers = #tpu.dot_dimension_numbers<[1], [0], [0], [1], [0, 0, 1, 1], [], []>} : vector<8x8xbf16>, vector<8x32xbf16>, vector<8x32xf32> -> vector<8x32xf32>
      %196 = arith.truncf %195 : vector<8x32xf32> to vector<8x32xbf16>
      %197 = arith.index_cast %arg16 : i32 to index
      %c0_102 = arith.constant 0 : index
      %c0_103 = arith.constant 0 : index
      %198 = vector.load %arg15[%197, %c0_102, %c0_103] : memref<4x8x32xbf16, #tpu.memory_space<vmem>>, vector<1x8x32xbf16>
      %199 = vector.shape_cast %198 : vector<1x8x32xbf16> to vector<8x32xbf16>
      %200 = vector.shape_cast %196 : vector<8x32xbf16> to vector<1x8x32xbf16>
      tpu.vector_store %arg15[%197, %c0_102, %c0_103], %200 {strides = array<i32>} : memref<4x8x32xbf16, #tpu.memory_space<vmem>>, vector<1x8x32xbf16>,
    }
    %c4_i32_60 = arith.constant 4 : i32
    %c0_61 = arith.constant 0 : index
    %c0_62 = arith.constant 0 : index
    %c0_63 = arith.constant 0 : index
    %128 = vector.load %arg15[%c0_61, %c0_62, %c0_63] : memref<4x8x32xbf16, #tpu.memory_space<vmem>>, vector<1x8x32xbf16>
    %129 = vector.shape_cast %128 : vector<1x8x32xbf16> to vector<8x32xbf16>
    %c1_64 = arith.constant 1 : index
    %c0_65 = arith.constant 0 : index
    %c0_66 = arith.constant 0 : index
    %130 = vector.load %arg15[%c1_64, %c0_65, %c0_66] : memref<4x8x32xbf16, #tpu.memory_space<vmem>>, vector<1x8x32xbf16>
    %131 = vector.shape_cast %130 : vector<1x8x32xbf16> to vector<8x32xbf16>
    %c2_67 = arith.constant 2 : index
    %c0_68 = arith.constant 0 : index
    %c0_69 = arith.constant 0 : index
    %132 = vector.load %arg15[%c2_67, %c0_68, %c0_69] : memref<4x8x32xbf16, #tpu.memory_space<vmem>>, vector<1x8x32xbf16>
    %133 = vector.shape_cast %132 : vector<1x8x32xbf16> to vector<8x32xbf16>
    %c3_70 = arith.constant 3 : index
    %c0_71 = arith.constant 0 : index
    %c0_72 = arith.constant 0 : index
    %134 = vector.load %arg15[%c3_70, %c0_71, %c0_72] : memref<4x8x32xbf16, #tpu.memory_space<vmem>>, vector<1x8x32xbf16>
    %135 = vector.shape_cast %134 : vector<1x8x32xbf16> to vector<8x32xbf16>
    %136 = tpu.concatenate %129, %131, %133, %135 in 1 : vector<8x32xbf16>, vector<8x32xbf16>, vector<8x32xbf16>, vector<8x32xbf16> -> vector<8x128xbf16>
    %c0_73 = arith.constant 0 : index
    %c0_74 = arith.constant 0 : index
    %137 = vector.load %arg7[%c0_73, %c0_74] : memref<128x128xbf16, #tpu.memory_space<vmem>>, vector<128x128xbf16>
    %cst_75 = arith.constant dense<0.000000e+00> : vector<8x128xf32>
    %138 = tpu.matmul %136, %137, %cst_75 {dimension_numbers = #tpu.dot_dimension_numbers<[1], [0], [0], [1], [0, 0, 1, 1], [], []>} : vector<8x128xbf16>, vector<128x128xbf16>, vector<8x128xf32> -> vector<8x128xf32>
    %139 = arith.addf %2, %138 : vector<8x128xf32>
    %c0_76 = arith.constant 0 : index
    %c0_77 = arith.constant 0 : index
    %140 = vector.load %arg8[%c0_76, %c0_77] : memref<1x128xf32, #tpu.memory_space<vmem>>, vector<1x128xf32>
    %141 = arith.mulf %139, %139 : vector<8x128xf32>
    %cst_78 = arith.constant dense<0.000000e+00> : vector<8xf32>
    %142 = vector.multi_reduction <add>, %141, %cst_78 [1] : vector<8x128xf32> to vector<8xf32>
    %143 = vector.shape_cast %142 : vector<8xf32> to vector<8x1xf32>
    %cst_79 = arith.constant 1.280000e+02 : f32
    %144 = vector.broadcast %cst_79 : f32 to vector<8x1xf32>
    %145 = arith.divf %143, %144 : vector<8x1xf32>
    %cst_80 = arith.constant 9.99999997E-7 : f32
    %146 = vector.broadcast %cst_80 : f32 to vector<8x1xf32>
    %147 = arith.addf %145, %146 : vector<8x1xf32>
    %148 = math.rsqrt %147 : vector<8x1xf32>
    %149 = vector.broadcast %148 : vector<8x1xf32> to vector<8x128xf32>
    %150 = arith.mulf %139, %149 : vector<8x128xf32>
    %151 = vector.broadcast %140 : vector<1x128xf32> to vector<8x128xf32>
    %152 = arith.mulf %150, %151 : vector<8x128xf32>
    %153 = arith.truncf %152 : vector<8x128xf32> to vector<8x128xbf16>
    %c0_81 = arith.constant 0 : index
    %c0_82 = arith.constant 0 : index
    %154 = vector.load %arg9[%c0_81, %c0_82] : memref<128x1024xbf16, #tpu.memory_space<vmem>>, vector<128x1024xbf16>
    %cst_83 = arith.constant dense<0.000000e+00> : vector<8x1024xf32>
    %155 = tpu.matmul %153, %154, %cst_83 {dimension_numbers = #tpu.dot_dimension_numbers<[1], [0], [0], [1], [0, 0, 1, 1], [], []>} : vector<8x128xbf16>, vector<128x1024xbf16>, vector<8x1024xf32> -> vector<8x1024xf32>
    %156 = vector.extract_strided_slice %155 {offsets = [0, 0], sizes = [8, 512], strides = [1, 1]} : vector<8x1024xf32> to vector<8x512xf32>
    %157 = vector.extract_strided_slice %155 {offsets = [0, 512], sizes = [8, 512], strides = [1, 1]} : vector<8x1024xf32> to vector<8x512xf32>
    %cst_84 = arith.constant 0.000000e+00 : f32
    %158 = vector.broadcast %cst_84 : f32 to vector<8x512xf32>
    %159 = arith.subf %158, %156 : vector<8x512xf32>
    %160 = math.exp %159 : vector<8x512xf32>
    %cst_85 = arith.constant 1.000000e+00 : f32
    %161 = vector.broadcast %cst_85 : f32 to vector<8x512xf32>
    %162 = arith.addf %161, %160 : vector<8x512xf32>
    %163 = arith.divf %156, %162 : vector<8x512xf32>
    %164 = arith.mulf %163, %157 : vector<8x512xf32>
    %165 = arith.truncf %164 : vector<8x512xf32> to vector<8x512xbf16>
    %c0_86 = arith.constant 0 : index
    %c0_87 = arith.constant 0 : index
    %166 = vector.load %arg10[%c0_86, %c0_87] : memref<512x128xbf16, #tpu.memory_space<vmem>>, vector<512x128xbf16>
    %cst_88 = arith.constant dense<0.000000e+00> : vector<8x128xf32>
    %167 = tpu.matmul %165, %166, %cst_88 {dimension_numbers = #tpu.dot_dimension_numbers<[1], [0], [0], [1], [0, 0, 1, 1], [], []>} : vector<8x512xbf16>, vector<512x128xbf16>, vector<8x128xf32> -> vector<8x128xf32>
    %168 = arith.addf %139, %167 : vector<8x128xf32>
    %169 = arith.truncf %168 : vector<8x128xf32> to vector<8x128xbf16>
    %c0_89 = arith.constant 0 : index
    %c0_90 = arith.constant 0 : index
    %c0_91 = arith.constant 0 : index
    %170 = vector.load %arg11[%c0_89, %c0_90, %c0_91] : memref<1x8x128xbf16, #tpu.memory_space<vmem>>, vector<1x8x128xbf16>
    %171 = vector.shape_cast %170 : vector<1x8x128xbf16> to vector<8x128xbf16>
    %172 = vector.shape_cast %169 : vector<8x128xbf16> to vector<1x8x128xbf16>
    tpu.vector_store %arg11[%c0_89, %c0_90, %c0_91], %172 {strides = array<i32>} : memref<1x8x128xbf16, #tpu.memory_space<vmem>>, vector<1x8x128xbf16>,
    return
  }
  func.func @transform_0(%arg0: i32) -> (i32, i32, i32) {
    %c0_i32 = arith.constant 0 : i32
    %c0_i32_0 = arith.constant 0 : i32
    %c0_i32_1 = arith.constant 0 : i32
    return %arg0, %c0_i32, %c0_i32_0 : i32, i32, i32
  }
  func.func @transform_1(%arg0: i32) -> (i32, i32, i32) {
    %c0_i32 = arith.constant 0 : i32
    %c0_i32_0 = arith.constant 0 : i32
    %c0_i32_1 = arith.constant 0 : i32
    return %arg0, %c0_i32, %c0_i32_0 : i32, i32, i32
  }
  func.func @transform_2(%arg0: i32) -> (i32, i32) {
    %c0_i32 = arith.constant 0 : i32
    %c0_i32_0 = arith.constant 0 : i32
    %c0_i32_1 = arith.constant 0 : i32
    return %c0_i32, %c0_i32_0 : i32, i32
  }
  func.func @transform_3(%arg0: i32) -> (i32, i32) {
    %c0_i32 = arith.constant 0 : i32
    %c0_i32_0 = arith.constant 0 : i32
    %c0_i32_1 = arith.constant 0 : i32
    return %c0_i32, %c0_i32_0 : i32, i32
  }
  func.func @transform_4(%arg0: i32) -> (i32, i32) {
    %c0_i32 = arith.constant 0 : i32
    %c0_i32_0 = arith.constant 0 : i32
    %c0_i32_1 = arith.constant 0 : i32
    return %c0_i32, %c0_i32_0 : i32, i32
  }
  func.func @transform_5(%arg0: i32) -> (i32, i32) {
    %c0_i32 = arith.constant 0 : i32
    %c0_i32_0 = arith.constant 0 : i32
    %c0_i32_1 = arith.constant 0 : i32
    return %c0_i32, %c0_i32_0 : i32, i32
  }
  func.func @transform_6(%arg0: i32) -> (i32, i32) {
    %c0_i32 = arith.constant 0 : i32
    %c0_i32_0 = arith.constant 0 : i32
    %c0_i32_1 = arith.constant 0 : i32
    return %c0_i32, %c0_i32_0 : i32, i32
  }
  func.func @transform_7(%arg0: i32) -> (i32, i32) {
    %c0_i32 = arith.constant 0 : i32
    %c0_i32_0 = arith.constant 0 : i32
    %c0_i32_1 = arith.constant 0 : i32
    return %c0_i32, %c0_i32_0 : i32, i32
  }
  func.func @transform_8(%arg0: i32) -> (i32, i32) {
    %c0_i32 = arith.constant 0 : i32
    %c0_i32_0 = arith.constant 0 : i32
    %c0_i32_1 = arith.constant 0 : i32
    return %c0_i32, %c0_i32_0 : i32, i32
  }
  func.func @transform_9(%arg0: i32) -> (i32, i32) {
    %c0_i32 = arith.constant 0 : i32
    %c0_i32_0 = arith.constant 0 : i32
    %c0_i32_1 = arith.constant 0 : i32
    return %c0_i32, %c0_i32_0 : i32, i32
  }
  func.func @transform_10(%arg0: i32) -> (i32, i32, i32) {
    %c0_i32 = arith.constant 0 : i32
    %c0_i32_0 = arith.constant 0 : i32
    %c0_i32_1 = arith.constant 0 : i32
    return %arg0, %c0_i32, %c0_i32_0 : i32, i32, i32
  }
}

</mosaic_0001>

<llo_original>
// kernel: tpu_custom_call.1
$region0: #{tpu_custom_call.1}
  #allocation0 [shape = 'u32[]', space=smem, size = 0x4, offset = 0x4, fixed_abs, tag = 'smem constant byte address 0x4 - core index']
  #allocation1 [shape = 'u32[144,128]{1,0:T(1,128)}', space=vmem, size = 0x12000, scoped, tag = 'internal scratch']
  %s0 = inlined_call_operand.hbm [shape: f32[8,128], index: 0, kind: input, shape index: {}]
  %s1 = inlined_call_operand.hbm [shape: f32[2,8,128], index: 1, kind: output, shape index: {}]
  %s2 = sld [smem:[#allocation0]]
  $region41: #{tpu_custom_call.1} parent=0
    _
  %s4 = ssub.s32 1, %s2
  %s5 = scalar_select 0, %s4, %s2
  $region1: #{tpu_custom_call.1} parent=0
    #allocation2 [shape = 'u8[4096]{0}', space=vmem, size = 0x1000, scoped, tag = 'input window, operand 0, single buffered']
    #allocation3 [shape = 's32[2]{0}', space=sflag, size = 0x8, scoped, tag = 'scoped memory for tpu_custom_call.1']
    #allocation4 [shape = 's32[2]{0}', space=sflag, size = 0x8, scoped, tag = 'scoped memory for tpu_custom_call.1']
    #allocation5 [shape = 'u8[8192]{0}', space=vmem, size = 0x2000, scoped, tag = 'output window, operand 0']
    %6 = vsyncpa [#allocation3], 0
    %7 = vsyncpa [#allocation4], 0
    %s8 = scalar_lea.sflag [#allocation4], 1
    %9 = vsyncpa %s8, 0
    loop: start=0, step=1, limit=4
    $region2: #{tpu_custom_call.1} parent=1 // loop_pre_header
      _
    $region3: #{tpu_custom_call.1} parent=1 // loop_header
      %s11 = sphi 0, %s15
      %p12 = scmp.ge.s32.totalorder %s11, 4
      %s19 = sphi 0, %s19
      %s21 = sphi 0, %s19
      %s22 = sphi 0, %s21
      %s36 = sphi 0, %s22
      %s42 = sphi 0, %s44
      %s45 = sphi 0, %s42
      %s46 = sphi 0, %s45
      %s62 = sphi 0, %s46
    $region4: #{tpu_custom_call.1} parent=1 // loop_header_branch
      %14 = sbr.rel (%p12) target = $region8
    $region5: #{tpu_custom_call.1} parent=1 // loop_body
      %s16 = ssub.s32 %s11, 1
      %s17 = ssub.s32 %s11, 2
      %s18 = sadd.s32 %s11, 1
      %s20 = sadd.s32 %s19, 1
      %p23 = scmp.eq.s32.totalorder %s11, 1
      %p24 = scmp.ne.s32.totalorder %s19, %s21
      %p25 = scmp.eq.s32.totalorder %s11, 0
      %p26 = por %p24, %p25
      %p27 = scmp.ne.s32.totalorder %s19, %s21
      %p28 = scmp.eq.s32.totalorder %s16, 1
      %p29 = por %p27, %p28
      %p30 = scmp.ne.s32.totalorder %s21, %s22
      %p31 = scmp.eq.s32.totalorder %s16, 0
      %p32 = por %p30, %p31
      %p33 = scmp.ne.s32.totalorder %s21, %s22
      %p34 = scmp.eq.s32.totalorder %s17, 1
      %p35 = por %p33, %p34
      %p37 = scmp.ne.s32.totalorder %s22, %s36
      %p38 = scmp.eq.s32.totalorder %s17, 0
      %p39 = por %p37, %p38
      %s40 = ssub.s32 %s11, %s18
      %p41 = scmp.eq.s32.totalorder %s40, 0
      %s43 = sadd.s32 %s42, 1
      %s44 = scalar_select %p41, %s42, %s43
      %p47 = pneg %p41
      %p48 = scmp.eq.s32.totalorder %s11, 1
      %p49 = por %p47, %p48
      %p50 = scmp.ne.s32.totalorder %s42, %s45
      %p51 = scmp.eq.s32.totalorder %s11, 0
      %p52 = por %p50, %p51
      %p53 = scmp.ne.s32.totalorder %s42, %s45
      %p54 = scmp.eq.s32.totalorder %s16, 1
      %p55 = por %p53, %p54
      %p56 = scmp.ne.s32.totalorder %s45, %s46
      %p57 = scmp.eq.s32.totalorder %s16, 0
      %p58 = por %p56, %p57
      %p59 = scmp.ne.s32.totalorder %s45, %s46
      %p60 = scmp.eq.s32.totalorder %s17, 1
      %p61 = por %p59, %p60
      %p63 = scmp.ne.s32.totalorder %s46, %s62
      %p64 = scmp.eq.s32.totalorder %s17, 0
      %p65 = por %p63, %p64
      %p66 = scmp.le.s32.totalorder 1, %s11
      %p67 = scmp.lt.s32.totalorder %s11, 3
      %p68 = pnand %p66, %p67
      %p69 = pneg %p68
      // Predicated region
      $region9: #{tpu_custom_call.1} parent=5 // pred_check
        _
      $region10: #{tpu_custom_call.1} parent=5 // pred_check_branch
        %71 = sbr.rel (%p68) target = $region12
      $region11: #{tpu_custom_call.1} parent=5 // pred_region
        %s72 = ssub.s32 %s11, 1
        // Predicated region
        $region13: #{tpu_custom_call.1} parent=11 // pred_check
          %p73 = pneg %p32
        $region14: #{tpu_custom_call.1} parent=11 // pred_check_branch
          %75 = sbr.rel (%p73) target = $region16
        $region15: #{tpu_custom_call.1} parent=11 // pred_region
          %s77 = ssub.s32 128, 128
          %78 = vsyncadd [#allocation3], %s77
          %s80 = sshll.u32 [#allocation2], 4
          %s81 = int_to_ptr.vmem [resolvable:$true] %s80
          %83 = dma.hbm_to_vmem [thread:$0]  %s0, 128, %s81, [#allocation3]
        $region16: #{tpu_custom_call.1} parent=11 // pred_fallthru
          _
      $region12: #{tpu_custom_call.1} parent=5 // pred_fallthru
        _
      %p84 = scmp.lt.s32.totalorder %s11, 2
      // Predicated region
      $region17: #{tpu_custom_call.1} parent=5 // pred_check
        %p85 = pneg %p84
      $region18: #{tpu_custom_call.1} parent=5 // pred_check_branch
        %87 = sbr.rel (%p85) target = $region20
      $region19: #{tpu_custom_call.1} parent=5 // pred_region
        _
      $region20: #{tpu_custom_call.1} parent=5 // pred_fallthru
        _
      %p88 = scmp.le.s32.totalorder 1, %s11
      %p89 = scmp.lt.s32.totalorder %s11, 3
      %p90 = pnand %p88, %p89
      %p91 = pneg %p90
      // Predicated region
      $region21: #{tpu_custom_call.1} parent=5 // pred_check
        _
      $region22: #{tpu_custom_call.1} parent=5 // pred_check_branch
        %93 = sbr.rel (%p90) target = $region24
      $region23: #{tpu_custom_call.1} parent=5 // pred_region
        %s94 = ssub.s32 %s11, 1
        // Predicated region
        $region25: #{tpu_custom_call.1} parent=23 // pred_check
          %p95 = pneg %p32
        $region26: #{tpu_custom_call.1} parent=23 // pred_check_branch
          %97 = sbr.rel (%p95) target = $region28
        $region27: #{tpu_custom_call.1} parent=23 // pred_region
          %98 = dma.done [#allocation3], 128
        $region28: #{tpu_custom_call.1} parent=23 // pred_fallthru
          _
        %p99 = pneg %p32
        %p100 = pneg %p29
        %p101 = pneg %p58
        %p102 = pneg %p55
        %s103 = sand.u32 %s45, 1
        %s104 = scalar_lea.sflag [#allocation4], %s103
        %s105 = sand.u32 %s45, 1
        %s106 = smul.addr %s105, 8
        %s107 = scalar_lea.vmem [#allocation5], %s106
        %v108 = vld [vmem:[#allocation2] sm:$0xff]
        %109 = vst [vmem:[%s107] sm:$0xff] %v108
        %s110 = sand.u32 %s45, 1
        %s111 = scalar_lea.sflag [#allocation4], %s110
        %s112 = sand.u32 %s45, 1
        %s113 = smul.addr %s112, 8
        %s114 = scalar_lea.vmem [#allocation5], %s113
        // Predicated region
        $region29: #{tpu_custom_call.1} parent=23 // pred_check
          %p115 = pneg %p55
        $region30: #{tpu_custom_call.1} parent=23 // pred_check_branch
          %117 = sbr.rel (%p115) target = $region32
        $region31: #{tpu_custom_call.1} parent=23 // pred_region
          %s119 = ssub.s32 128, 128
          %120 = vsyncadd %s111, %s119
          %s121 = smul.addr %s16, 128
          %s122 = scalar_lea.hbm %s1, %s121
          %s124 = sshll.u32 %s114, 4
          %s125 = int_to_ptr.vmem [resolvable:$true] %s124
          %127 = dma.vmem_to_hbm [thread:$0]  %s125, 128, %s122, %s111
        $region32: #{tpu_custom_call.1} parent=23 // pred_fallthru
          _
      $region24: #{tpu_custom_call.1} parent=5 // pred_fallthru
        _
      %p128 = scmp.le.s32.totalorder 2, %s11
      // Predicated region
      $region33: #{tpu_custom_call.1} parent=5 // pred_check
        %p129 = pneg %p128
      $region34: #{tpu_custom_call.1} parent=5 // pred_check_branch
        %131 = sbr.rel (%p129) target = $region36
      $region35: #{tpu_custom_call.1} parent=5 // pred_region
        %s132 = ssub.s32 %s11, 2
        // Predicated region
        $region37: #{tpu_custom_call.1} parent=35 // pred_check
          %p133 = pneg %p61
        $region38: #{tpu_custom_call.1} parent=35 // pred_check_branch
          %135 = sbr.rel (%p133) target = $region40
        $region39: #{tpu_custom_call.1} parent=35 // pred_region
          %s136 = sand.u32 %s46, 1
          %s137 = scalar_lea.sflag [#allocation4], %s136
          %s138 = sand.u32 %s46, 1
          %s139 = smul.addr %s138, 8
          %s140 = scalar_lea.vmem [#allocation5], %s139
          %141 = dma.done %s137, 128
        $region40: #{tpu_custom_call.1} parent=35 // pred_fallthru
          _
      $region36: #{tpu_custom_call.1} parent=5 // pred_fallthru
        _
    $region6: #{tpu_custom_call.1} parent=1 // loop_footer
      %s15 = sadd.s32 1, %s11
    $region7: #{tpu_custom_call.1} parent=1 // loop_footer_branch
      %10 = sbr.rel target = $region3
    $region8: #{tpu_custom_call.1} parent=1 // loop_exit
      _
    %142 = vsyncpa [#allocation3], 1
    %s143 = scalar_lea.sflag [#allocation3], 1
    %144 = vsyncpa %s143, 1
    %145 = vsyncpa [#allocation4], 1
    %s146 = scalar_lea.sflag [#allocation4], 1
    %147 = vsyncpa %s146, 1

// kernel: tpu_custom_call.1
$region0: #{tpu_custom_call.1}
  #allocation0 [shape = 'u32[]', space=smem, size = 0x4, offset = 0x4, fixed_abs, tag = 'smem constant byte address 0x4 - core index']
  #allocation1 [shape = 'u32[144,128]{1,0:T(1,128)}', space=vmem, size = 0x12000, scoped, tag = 'internal scratch']
  #allocation2 [shape = 'bf16[4,8,32]{2,1,0:T(8,128)(2,1)}', space=vmem, size = 0x2000, scoped, tag = 'scratch operand']
  #allocation3 [shape = 'bf16[4,8,32]{2,1,0:T(8,128)(2,1)}', space=vmem, size = 0x2000, scoped, tag = 'scratch operand']
  #allocation4 [shape = 'bf16[4,8,32]{2,1,0:T(8,128)(2,1)}', space=vmem, size = 0x2000, scoped, tag = 'scratch operand']
  #allocation5 [shape = 'bf16[4,8,32]{2,1,0:T(8,128)(2,1)}', space=vmem, size = 0x2000, scoped, tag = 'scratch operand']
  %s0 = inlined_call_operand.hbm [shape: bf16[2,8,128], index: 0, kind: input, shape index: {}]
  %s1 = inlined_call_operand.hbm [shape: f32[2,1,8], index: 1, kind: input, shape index: {}]
  %s2 = inlined_call_operand.hbm [shape: f32[8,32], index: 2, kind: input, shape index: {}]
  %s3 = inlined_call_operand.hbm [shape: f32[8,32], index: 3, kind: input, shape index: {}]
  %s4 = inlined_call_operand.hbm [shape: f32[1,128], index: 4, kind: input, shape index: {}]
  %s5 = inlined_call_operand.hbm [shape: bf16[128,384], index: 5, kind: input, shape index: {}]
  %s6 = inlined_call_operand.hbm [shape: bf16[128,128], index: 6, kind: input, shape index: {}]
  %s7 = inlined_call_operand.hbm [shape: f32[1,128], index: 7, kind: input, shape index: {}]
  %s8 = inlined_call_operand.hbm [shape: bf16[128,1024], index: 8, kind: input, shape index: {}]
  %s9 = inlined_call_operand.hbm [shape: bf16[512,128], index: 9, kind: input, shape index: {}]
  %s10 = inlined_call_operand.hbm [shape: bf16[2,8,128], index: 10, kind: output, shape index: {}]
  %s11 = sld [smem:[#allocation0]]
  $region120: #{tpu_custom_call.1} parent=0
    _
  %s13 = ssub.s32 1, %s11
  %s14 = scalar_select 0, %s13, %s11
  $region1: #{tpu_custom_call.1} parent=0
    #allocation6 [shape = 'u8[4096]{0}', space=vmem, size = 0x1000, scoped, tag = 'input window, operand 0']
    #allocation7 [shape = 's32[2]{0}', space=sflag, size = 0x8, scoped, tag = 'scoped memory for tpu_custom_call.1']
    #allocation8 [shape = 's32[2]{0}', space=sflag, size = 0x8, scoped, tag = 'scoped memory for tpu_custom_call.1']
    #allocation9 [shape = 'u8[1024]{0}', space=vmem, size = 0x400, scoped, tag = 'input window, operand 1']
    #allocation10 [shape = 's32[2]{0}', space=sflag, size = 0x8, scoped, tag = 'scoped memory for tpu_custom_call.1']
    #allocation11 [shape = 'u8[4096]{0}', space=vmem, size = 0x1000, scoped, tag = 'input window, operand 2, single buffered']
    #allocation12 [shape = 'u8[4096]{0}', space=vmem, size = 0x1000, scoped, tag = 'input window, operand 3, single buffered']
    #allocation13 [shape = 's32[1]{0}', space=sflag, size = 0x4, scoped, tag = 'scoped memory for tpu_custom_call.1']
    #allocation14 [shape = 'u8[512]{0}', space=vmem, size = 0x400, scoped, tag = 'input window, operand 4, single buffered']
    #allocation15 [shape = 'u8[98304]{0}', space=vmem, size = 0x18000, scoped, tag = 'input window, operand 5, single buffered']
    #allocation16 [shape = 's32[1]{0}', space=sflag, size = 0x4, scoped, tag = 'scoped memory for tpu_custom_call.1']
    #allocation17 [shape = 'u8[32768]{0}', space=vmem, size = 0x8000, scoped, tag = 'input window, operand 6, single buffered']
    #allocation18 [shape = 'u8[512]{0}', space=vmem, size = 0x400, scoped, tag = 'input window, operand 7, single buffered']
    #allocation19 [shape = 's32[1]{0}', space=sflag, size = 0x4, scoped, tag = 'scoped memory for tpu_custom_call.1']
    #allocation20 [shape = 'u8[262144]{0}', space=vmem, size = 0x40000, scoped, tag = 'input window, operand 8, single buffered']
    #allocation21 [shape = 'u8[131072]{0}', space=vmem, size = 0x20000, scoped, tag = 'input window, operand 9, single buffered']
    #allocation22 [shape = 's32[1]{0}', space=sflag, size = 0x4, scoped, tag = 'scoped memory for tpu_custom_call.1']
    #allocation23 [shape = 'u8[4096]{0}', space=vmem, size = 0x1000, scoped, tag = 'output window, operand 0']
    %15 = vsyncpa [#allocation7], 0
    %s16 = scalar_lea.sflag [#allocation7], 1
    %17 = vsyncpa %s16, 0
    %18 = vsyncpa [#allocation10], 0
    %s19 = scalar_lea.sflag [#allocation10], 1
    %20 = vsyncpa %s19, 0
    %21 = vsyncpa [#allocation13], 0
    %22 = vsyncpa [#allocation16], 0
    %23 = vsyncpa [#allocation19], 0
    %24 = vsyncpa [#allocation22], 0
    %25 = vsyncpa [#allocation8], 0
    %s26 = scalar_lea.sflag [#allocation8], 1
    %27 = vsyncpa %s26, 0
    loop: start=0, step=1, limit=4
    $region2: #{tpu_custom_call.1} parent=1 // loop_pre_header
      _
    $region3: #{tpu_custom_call.1} parent=1 // loop_header
      %s29 = sphi 0, %s33
      %p30 = scmp.ge.s32.totalorder %s29, 4
      %s39 = sphi 0, %s41
      %s42 = sphi 0, %s39
      %s43 = sphi 0, %s42
      %s59 = sphi 0, %s43
      %s65 = sphi 0, %s67
      %s68 = sphi 0, %s65
      %s69 = sphi 0, %s68
      %s85 = sphi 0, %s69
      %s89 = sphi 0, %s89
      %s91 = sphi 0, %s89
      %s92 = sphi 0, %s91
      %s106 = sphi 0, %s92
      %s110 = sphi 0, %s110
      %s112 = sphi 0, %s110
      %s113 = sphi 0, %s112
      %s127 = sphi 0, %s113
      %s131 = sphi 0, %s131
      %s133 = sphi 0, %s131
      %s134 = sphi 0, %s133
      %s148 = sphi 0, %s134
      %s152 = sphi 0, %s152
      %s154 = sphi 0, %s152
      %s155 = sphi 0, %s154
      %s169 = sphi 0, %s155
      %s173 = sphi 0, %s173
      %s175 = sphi 0, %s173
      %s176 = sphi 0, %s175
      %s190 = sphi 0, %s176
      %s194 = sphi 0, %s194
      %s196 = sphi 0, %s194
      %s197 = sphi 0, %s196
      %s211 = sphi 0, %s197
      %s215 = sphi 0, %s215
      %s217 = sphi 0, %s215
      %s218 = sphi 0, %s217
      %s232 = sphi 0, %s218
      %s236 = sphi 0, %s236
      %s238 = sphi 0, %s236
      %s239 = sphi 0, %s238
      %s253 = sphi 0, %s239
      %s259 = sphi 0, %s261
      %s262 = sphi 0, %s259
      %s263 = sphi 0, %s262
      %s279 = sphi 0, %s263
    $region4: #{tpu_custom_call.1} parent=1 // loop_header_branch
      %32 = sbr.rel (%p30) target = $region8
    $region5: #{tpu_custom_call.1} parent=1 // loop_body
      %s34 = ssub.s32 %s29, 1
      %s35 = ssub.s32 %s29, 2
      %s36 = sadd.s32 %s29, 1
      %s37 = ssub.s32 %s29, %s36
      %p38 = scmp.eq.s32.totalorder %s37, 0
      %s40 = sadd.s32 %s39, 1
      %s41 = scalar_select %p38, %s39, %s40
      %p44 = pneg %p38
      %p45 = scmp.eq.s32.totalorder %s29, 1
      %p46 = por %p44, %p45
      %p47 = scmp.ne.s32.totalorder %s39, %s42
      %p48 = scmp.eq.s32.totalorder %s29, 0
      %p49 = por %p47, %p48
      %p50 = scmp.ne.s32.totalorder %s39, %s42
      %p51 = scmp.eq.s32.totalorder %s34, 1
      %p52 = por %p50, %p51
      %p53 = scmp.ne.s32.totalorder %s42, %s43
      %p54 = scmp.eq.s32.totalorder %s34, 0
      %p55 = por %p53, %p54
      %p56 = scmp.ne.s32.totalorder %s42, %s43
      %p57 = scmp.eq.s32.totalorder %s35, 1
      %p58 = por %p56, %p57
      %p60 = scmp.ne.s32.totalorder %s43, %s59
      %p61 = scmp.eq.s32.totalorder %s35, 0
      %p62 = por %p60, %p61
      %s63 = ssub.s32 %s29, %s36
      %p64 = scmp.eq.s32.totalorder %s63, 0
      %s66 = sadd.s32 %s65, 1
      %s67 = scalar_select %p64, %s65, %s66
      %p70 = pneg %p64
      %p71 = scmp.eq.s32.totalorder %s29, 1
      %p72 = por %p70, %p71
      %p73 = scmp.ne.s32.totalorder %s65, %s68
      %p74 = scmp.eq.s32.totalorder %s29, 0
      %p75 = por %p73, %p74
      %p76 = scmp.ne.s32.totalorder %s65, %s68
      %p77 = scmp.eq.s32.totalorder %s34, 1
      %p78 = por %p76, %p77
      %p79 = scmp.ne.s32.totalorder %s68, %s69
      %p80 = scmp.eq.s32.totalorder %s34, 0
      %p81 = por %p79, %p80
      %p82 = scmp.ne.s32.totalorder %s68, %s69
      %p83 = scmp.eq.s32.totalorder %s35, 1
      %p84 = por %p82, %p83
      %p86 = scmp.ne.s32.totalorder %s69, %s85
      %p87 = scmp.eq.s32.totalorder %s35, 0
      %p88 = por %p86, %p87
      %s90 = sadd.s32 %s89, 1
      %p93 = scmp.eq.s32.totalorder %s29, 1
      %p94 = scmp.ne.s32.totalorder %s89, %s91
      %p95 = scmp.eq.s32.totalorder %s29, 0
      %p96 = por %p94, %p95
      %p97 = scmp.ne.s32.totalorder %s89, %s91
      %p98 = scmp.eq.s32.totalorder %s34, 1
      %p99 = por %p97, %p98
      %p100 = scmp.ne.s32.totalorder %s91, %s92
      %p101 = scmp.eq.s32.totalorder %s34, 0
      %p102 = por %p100, %p101
      %p103 = scmp.ne.s32.totalorder %s91, %s92
      %p104 = scmp.eq.s32.totalorder %s35, 1
      %p105 = por %p103, %p104
      %p107 = scmp.ne.s32.totalorder %s92, %s106
      %p108 = scmp.eq.s32.totalorder %s35, 0
      %p109 = por %p107, %p108
      %s111 = sadd.s32 %s110, 1
      %p114 = scmp.eq.s32.totalorder %s29, 1
      %p115 = scmp.ne.s32.totalorder %s110, %s112
      %p116 = scmp.eq.s32.totalorder %s29, 0
      %p117 = por %p115, %p116
      %p118 = scmp.ne.s32.totalorder %s110, %s112
      %p119 = scmp.eq.s32.totalorder %s34, 1
      %p120 = por %p118, %p119
      %p121 = scmp.ne.s32.totalorder %s112, %s113
      %p122 = scmp.eq.s32.totalorder %s34, 0
      %p123 = por %p121, %p122
      %p124 = scmp.ne.s32.totalorder %s112, %s113
      %p125 = scmp.eq.s32.totalorder %s35, 1
      %p126 = por %p124, %p125
      %p128 = scmp.ne.s32.totalorder %s113, %s127
      %p129 = scmp.eq.s32.totalorder %s35, 0
      %p130 = por %p128, %p129
      %s132 = sadd.s32 %s131, 1
      %p135 = scmp.eq.s32.totalorder %s29, 1
      %p136 = scmp.ne.s32.totalorder %s131, %s133
      %p137 = scmp.eq.s32.totalorder %s29, 0
      %p138 = por %p136, %p137
      %p139 = scmp.ne.s32.totalorder %s131, %s133
      %p140 = scmp.eq.s32.totalorder %s34, 1
      %p141 = por %p139, %p140
      %p142 = scmp.ne.s32.totalorder %s133, %s134
      %p143 = scmp.eq.s32.totalorder %s34, 0
      %p144 = por %p142, %p143
      %p145 = scmp.ne.s32.totalorder %s133, %s134
      %p146 = scmp.eq.s32.totalorder %s35, 1
      %p147 = por %p145, %p146
      %p149 = scmp.ne.s32.totalorder %s134, %s148
      %p150 = scmp.eq.s32.totalorder %s35, 0
      %p151 = por %p149, %p150
      %s153 = sadd.s32 %s152, 1
      %p156 = scmp.eq.s32.totalorder %s29, 1
      %p157 = scmp.ne.s32.totalorder %s152, %s154
      %p158 = scmp.eq.s32.totalorder %s29, 0
      %p159 = por %p157, %p158
      %p160 = scmp.ne.s32.totalorder %s152, %s154
      %p161 = scmp.eq.s32.totalorder %s34, 1
      %p162 = por %p160, %p161
      %p163 = scmp.ne.s32.totalorder %s154, %s155
      %p164 = scmp.eq.s32.totalorder %s34, 0
      %p165 = por %p163, %p164
      %p166 = scmp.ne.s32.totalorder %s154, %s155
      %p167 = scmp.eq.s32.totalorder %s35, 1
      %p168 = por %p166, %p167
      %p170 = scmp.ne.s32.totalorder %s155, %s169
      %p171 = scmp.eq.s32.totalorder %s35, 0
      %p172 = por %p170, %p171
      %s174 = sadd.s32 %s173, 1
      %p177 = scmp.eq.s32.totalorder %s29, 1
      %p178 = scmp.ne.s32.totalorder %s173, %s175
      %p179 = scmp.eq.s32.totalorder %s29, 0
      %p180 = por %p178, %p179
      %p181 = scmp.ne.s32.totalorder %s173, %s175
      %p182 = scmp.eq.s32.totalorder %s34, 1
      %p183 = por %p181, %p182
      %p184 = scmp.ne.s32.totalorder %s175, %s176
      %p185 = scmp.eq.s32.totalorder %s34, 0
      %p186 = por %p184, %p185
      %p187 = scmp.ne.s32.totalorder %s175, %s176
      %p188 = scmp.eq.s32.totalorder %s35, 1
      %p189 = por %p187, %p188
      %p191 = scmp.ne.s32.totalorder %s176, %s190
      %p192 = scmp.eq.s32.totalorder %s35, 0
      %p193 = por %p191, %p192
      %s195 = sadd.s32 %s194, 1
      %p198 = scmp.eq.s32.totalorder %s29, 1
      %p199 = scmp.ne.s32.totalorder %s194, %s196
      %p200 = scmp.eq.s32.totalorder %s29, 0
      %p201 = por %p199, %p200
      %p202 = scmp.ne.s32.totalorder %s194, %s196
      %p203 = scmp.eq.s32.totalorder %s34, 1
      %p204 = por %p202, %p203
      %p205 = scmp.ne.s32.totalorder %s196, %s197
      %p206 = scmp.eq.s32.totalorder %s34, 0
      %p207 = por %p205, %p206
      %p208 = scmp.ne.s32.totalorder %s196, %s197
      %p209 = scmp.eq.s32.totalorder %s35, 1
      %p210 = por %p208, %p209
      %p212 = scmp.ne.s32.totalorder %s197, %s211
      %p213 = scmp.eq.s32.totalorder %s35, 0
      %p214 = por %p212, %p213
      %s216 = sadd.s32 %s215, 1
      %p219 = scmp.eq.s32.totalorder %s29, 1
      %p220 = scmp.ne.s32.totalorder %s215, %s217
      %p221 = scmp.eq.s32.totalorder %s29, 0
      %p222 = por %p220, %p221
      %p223 = scmp.ne.s32.totalorder %s215, %s217
      %p224 = scmp.eq.s32.totalorder %s34, 1
      %p225 = por %p223, %p224
      %p226 = scmp.ne.s32.totalorder %s217, %s218
      %p227 = scmp.eq.s32.totalorder %s34, 0
      %p228 = por %p226, %p227
      %p229 = scmp.ne.s32.totalorder %s217, %s218
      %p230 = scmp.eq.s32.totalorder %s35, 1
      %p231 = por %p229, %p230
      %p233 = scmp.ne.s32.totalorder %s218, %s232
      %p234 = scmp.eq.s32.totalorder %s35, 0
      %p235 = por %p233, %p234
      %s237 = sadd.s32 %s236, 1
      %p240 = scmp.eq.s32.totalorder %s29, 1
      %p241 = scmp.ne.s32.totalorder %s236, %s238
      %p242 = scmp.eq.s32.totalorder %s29, 0
      %p243 = por %p241, %p242
      %p244 = scmp.ne.s32.totalorder %s236, %s238
      %p245 = scmp.eq.s32.totalorder %s34, 1
      %p246 = por %p244, %p245
      %p247 = scmp.ne.s32.totalorder %s238, %s239
      %p248 = scmp.eq.s32.totalorder %s34, 0
      %p249 = por %p247, %p248
      %p250 = scmp.ne.s32.totalorder %s238, %s239
      %p251 = scmp.eq.s32.totalorder %s35, 1
      %p252 = por %p250, %p251
      %p254 = scmp.ne.s32.totalorder %s239, %s253
      %p255 = scmp.eq.s32.totalorder %s35, 0
      %p256 = por %p254, %p255
      %s257 = ssub.s32 %s29, %s36
      %p258 = scmp.eq.s32.totalorder %s257, 0
      %s260 = sadd.s32 %s259, 1
      %s261 = scalar_select %p258, %s259, %s260
      %p264 = pneg %p258
      %p265 = scmp.eq.s32.totalorder %s29, 1
      %p266 = por %p264, %p265
      %p267 = scmp.ne.s32.totalorder %s259, %s262
      %p268 = scmp.eq.s32.totalorder %s29, 0
      %p269 = por %p267, %p268
      %p270 = scmp.ne.s32.totalorder %s259, %s262
      %p271 = scmp.eq.s32.totalorder %s34, 1
      %p272 = por %p270, %p271
      %p273 = scmp.ne.s32.totalorder %s262, %s263
      %p274 = scmp.eq.s32.totalorder %s34, 0
      %p275 = por %p273, %p274
      %p276 = scmp.ne.s32.totalorder %s262, %s263
      %p277 = scmp.eq.s32.totalorder %s35, 1
      %p278 = por %p276, %p277
      %p280 = scmp.ne.s32.totalorder %s263, %s279
      %p281 = scmp.eq.s32.totalorder %s35, 0
      %p282 = por %p280, %p281
      %p283 = scmp.le.s32.totalorder 1, %s29
      %p284 = scmp.lt.s32.totalorder %s29, 3
      %p285 = pnand %p283, %p284
      %p286 = pneg %p285
      // Predicated region
      $region9: #{tpu_custom_call.1} parent=5 // pred_check
        _
      $region10: #{tpu_custom_call.1} parent=5 // pred_check_branch
        %288 = sbr.rel (%p285) target = $region12
      $region11: #{tpu_custom_call.1} parent=5 // pred_region
        %s289 = ssub.s32 %s29, 1
        // Predicated region
        $region13: #{tpu_custom_call.1} parent=11 // pred_check
          %p290 = pneg %p102
        $region14: #{tpu_custom_call.1} parent=11 // pred_check_branch
          %292 = sbr.rel (%p290) target = $region16
        $region15: #{tpu_custom_call.1} parent=11 // pred_region
          %s294 = ssub.s32 128, 128
          %295 = vsyncadd [#allocation10], %s294
          %s297 = sshll.u32 [#allocation11], 4
          %s298 = int_to_ptr.vmem [resolvable:$true] %s297
          %300 = dma.hbm_to_vmem [thread:$0]  %s2, 128, %s298, [#allocation10]
        $region16: #{tpu_custom_call.1} parent=11 // pred_fallthru
          _
        // Predicated region
        $region17: #{tpu_custom_call.1} parent=11 // pred_check
          %p301 = pneg %p123
        $region18: #{tpu_custom_call.1} parent=11 // pred_check_branch
          %303 = sbr.rel (%p301) target = $region20
        $region19: #{tpu_custom_call.1} parent=11 // pred_region
          %s305 = ssub.s32 128, 128
          %306 = vsyncadd [#allocation13], %s305
          %s308 = sshll.u32 [#allocation12], 4
          %s309 = int_to_ptr.vmem [resolvable:$true] %s308
          %311 = dma.hbm_to_vmem [thread:$0]  %s3, 128, %s309, [#allocation13]
        $region20: #{tpu_custom_call.1} parent=11 // pred_fallthru
          _
        // Predicated region
        $region21: #{tpu_custom_call.1} parent=11 // pred_check
          %p312 = pneg %p144
        $region22: #{tpu_custom_call.1} parent=11 // pred_check_branch
          %314 = sbr.rel (%p312) target = $region24
        $region23: #{tpu_custom_call.1} parent=11 // pred_region
          %s316 = ssub.s32 16, 16
          %317 = vsyncadd [#allocation13], %s316
          %s319 = sshll.u32 [#allocation14], 4
          %s320 = int_to_ptr.vmem [resolvable:$true] %s319
          %322 = dma.hbm_to_vmem [thread:$0]  %s4, 16, %s320, [#allocation13]
        $region24: #{tpu_custom_call.1} parent=11 // pred_fallthru
          _
        // Predicated region
        $region25: #{tpu_custom_call.1} parent=11 // pred_check
          %p323 = pneg %p165
        $region26: #{tpu_custom_call.1} parent=11 // pred_check_branch
          %325 = sbr.rel (%p323) target = $region28
        $region27: #{tpu_custom_call.1} parent=11 // pred_region
          %s327 = ssub.s32 3072, 3072
          %328 = vsyncadd [#allocation16], %s327
          %s329 = sshll.u32 [#allocation15], 4
          %s330 = int_to_ptr.vmem [resolvable:$true] %s329
          %335 = dma.hbm_to_vmem [thread:$0]  %s5, 3072, %s330, [#allocation16], 192, 192, 12
        $region28: #{tpu_custom_call.1} parent=11 // pred_fallthru
          _
        // Predicated region
        $region29: #{tpu_custom_call.1} parent=11 // pred_check
          %p336 = pneg %p186
        $region30: #{tpu_custom_call.1} parent=11 // pred_check_branch
          %338 = sbr.rel (%p336) target = $region32
        $region31: #{tpu_custom_call.1} parent=11 // pred_region
          %s340 = ssub.s32 1024, 1024
          %341 = vsyncadd [#allocation16], %s340
          %s342 = sshll.u32 [#allocation17], 4
          %s343 = int_to_ptr.vmem [resolvable:$true] %s342
          %348 = dma.hbm_to_vmem [thread:$0]  %s6, 1024, %s343, [#allocation16], 64, 64, 4
        $region32: #{tpu_custom_call.1} parent=11 // pred_fallthru
          _
        // Predicated region
        $region33: #{tpu_custom_call.1} parent=11 // pred_check
          %p349 = pneg %p207
        $region34: #{tpu_custom_call.1} parent=11 // pred_check_branch
          %351 = sbr.rel (%p349) target = $region36
        $region35: #{tpu_custom_call.1} parent=11 // pred_region
          %s353 = ssub.s32 16, 16
          %354 = vsyncadd [#allocation19], %s353
          %s356 = sshll.u32 [#allocation18], 4
          %s357 = int_to_ptr.vmem [resolvable:$true] %s356
          %359 = dma.hbm_to_vmem [thread:$0]  %s7, 16, %s357, [#allocation19]
        $region36: #{tpu_custom_call.1} parent=11 // pred_fallthru
          _
        // Predicated region
        $region37: #{tpu_custom_call.1} parent=11 // pred_check
          %p360 = pneg %p228
        $region38: #{tpu_custom_call.1} parent=11 // pred_check_branch
          %362 = sbr.rel (%p360) target = $region40
        $region39: #{tpu_custom_call.1} parent=11 // pred_region
          %s364 = ssub.s32 8192, 8192
          %365 = vsyncadd [#allocation19], %s364
          %s366 = sshll.u32 [#allocation20], 4
          %s367 = int_to_ptr.vmem [resolvable:$true] %s366
          %372 = dma.hbm_to_vmem [thread:$0]  %s8, 8192, %s367, [#allocation19], 512, 512, 32
        $region40: #{tpu_custom_call.1} parent=11 // pred_fallthru
          _
        // Predicated region
        $region41: #{tpu_custom_call.1} parent=11 // pred_check
          %p373 = pneg %p249
        $region42: #{tpu_custom_call.1} parent=11 // pred_check_branch
          %375 = sbr.rel (%p373) target = $region44
        $region43: #{tpu_custom_call.1} parent=11 // pred_region
          %s377 = ssub.s32 4096, 4096
          %378 = vsyncadd [#allocation22], %s377
          %s379 = sshll.u32 [#allocation21], 4
          %s380 = int_to_ptr.vmem [resolvable:$true] %s379
          %385 = dma.hbm_to_vmem [thread:$0]  %s9, 4096, %s380, [#allocation22], 64, 64, 4
        $region44: #{tpu_custom_call.1} parent=11 // pred_fallthru
          _
      $region12: #{tpu_custom_call.1} parent=5 // pred_fallthru
        _
      %p386 = scmp.lt.s32.totalorder %s29, 2
      // Predicated region
      $region45: #{tpu_custom_call.1} parent=5 // pred_check
        %p387 = pneg %p386
      $region46: #{tpu_custom_call.1} parent=5 // pred_check_branch
        %389 = sbr.rel (%p387) target = $region48
      $region47: #{tpu_custom_call.1} parent=5 // pred_region
        // Predicated region
        $region49: #{tpu_custom_call.1} parent=47 // pred_check
          %p390 = pneg %p49
        $region50: #{tpu_custom_call.1} parent=47 // pred_check_branch
          %392 = sbr.rel (%p390) target = $region52
        $region51: #{tpu_custom_call.1} parent=47 // pred_region
          %s393 = sand.u32 %s39, 1
          %s394 = scalar_lea.sflag [#allocation7], %s393
          %s395 = sand.u32 %s39, 1
          %s396 = smul.addr %s395, 4
          %s397 = scalar_lea.vmem [#allocation6], %s396
          %s399 = ssub.s32 64, 64
          %400 = vsyncadd %s394, %s399
          %s401 = smul.addr %s29, 64
          %s402 = scalar_lea.hbm %s0, %s401
          %s404 = sshll.u32 %s397, 4
          %s405 = int_to_ptr.vmem [resolvable:$true] %s404
          %407 = dma.hbm_to_vmem [thread:$0]  %s402, 64, %s405, %s394
        $region52: #{tpu_custom_call.1} parent=47 // pred_fallthru
          _
        // Predicated region
        $region53: #{tpu_custom_call.1} parent=47 // pred_check
          %p408 = pneg %p75
        $region54: #{tpu_custom_call.1} parent=47 // pred_check_branch
          %410 = sbr.rel (%p408) target = $region56
        $region55: #{tpu_custom_call.1} parent=47 // pred_region
          %s411 = sand.u32 %s29, 1
          %s412 = scalar_lea.sflag [#allocation10], %s411
          %s413 = sand.u32 %s65, 1
          %s414 = scalar_lea.vmem [#allocation9], %s413
          %s416 = ssub.s32 16, 16
          %417 = vsyncadd %s412, %s416
          %s418 = smul.addr %s29, 16
          %s419 = scalar_lea.hbm %s1, %s418
          %s421 = sshll.u32 %s414, 4
          %s422 = int_to_ptr.vmem [resolvable:$true] %s421
          %424 = dma.hbm_to_vmem [thread:$0]  %s419, 16, %s422, %s412
        $region56: #{tpu_custom_call.1} parent=47 // pred_fallthru
          _
      $region48: #{tpu_custom_call.1} parent=5 // pred_fallthru
        _
      %p425 = scmp.le.s32.totalorder 1, %s29
      %p426 = scmp.lt.s32.totalorder %s29, 3
      %p427 = pnand %p425, %p426
      %p428 = pneg %p427
      // Predicated region
      $region57: #{tpu_custom_call.1} parent=5 // pred_check
        _
      $region58: #{tpu_custom_call.1} parent=5 // pred_check_branch
        %430 = sbr.rel (%p427) target = $region60
      $region59: #{tpu_custom_call.1} parent=5 // pred_region
        %s431 = ssub.s32 %s29, 1
        %s432 = sand.u32 %s42, 1
        %s433 = scalar_lea.sflag [#allocation7], %s432
        %s434 = sand.u32 %s42, 1
        %s435 = smul.addr %s434, 4
        %s436 = scalar_lea.vmem [#allocation6], %s435
        // Predicated region
        $region61: #{tpu_custom_call.1} parent=59 // pred_check
          %p437 = pneg %p55
        $region62: #{tpu_custom_call.1} parent=59 // pred_check_branch
          %439 = sbr.rel (%p437) target = $region64
        $region63: #{tpu_custom_call.1} parent=59 // pred_region
          %440 = dma.done %s433, 64
        $region64: #{tpu_custom_call.1} parent=59 // pred_fallthru
          _
        %s441 = sand.u32 %s34, 1
        %s442 = scalar_lea.sflag [#allocation10], %s441
        %s443 = sand.u32 %s68, 1
        %s444 = scalar_lea.vmem [#allocation9], %s443
        // Predicated region
        $region65: #{tpu_custom_call.1} parent=59 // pred_check
          %p445 = pneg %p81
        $region66: #{tpu_custom_call.1} parent=59 // pred_check_branch
          %447 = sbr.rel (%p445) target = $region68
        $region67: #{tpu_custom_call.1} parent=59 // pred_region
          %448 = dma.done %s442, 16
        $region68: #{tpu_custom_call.1} parent=59 // pred_fallthru
          _
        // Predicated region
        $region69: #{tpu_custom_call.1} parent=59 // pred_check
          %p449 = pneg %p102
        $region70: #{tpu_custom_call.1} parent=59 // pred_check_branch
          %451 = sbr.rel (%p449) target = $region72
        $region71: #{tpu_custom_call.1} parent=59 // pred_region
          %452 = dma.done [#allocation10], 128
        $region72: #{tpu_custom_call.1} parent=59 // pred_fallthru
          _
        // Predicated region
        $region73: #{tpu_custom_call.1} parent=59 // pred_check
          %p453 = pneg %p123
        $region74: #{tpu_custom_call.1} parent=59 // pred_check_branch
          %455 = sbr.rel (%p453) target = $region76
        $region75: #{tpu_custom_call.1} parent=59 // pred_region
          %456 = dma.done [#allocation13], 128
        $region76: #{tpu_custom_call.1} parent=59 // pred_fallthru
          _
        // Predicated region
        $region77: #{tpu_custom_call.1} parent=59 // pred_check
          %p457 = pneg %p144
        $region78: #{tpu_custom_call.1} parent=59 // pred_check_branch
          %459 = sbr.rel (%p457) target = $region80
        $region79: #{tpu_custom_call.1} parent=59 // pred_region
          %460 = dma.done [#allocation13], 16
        $region80: #{tpu_custom_call.1} parent=59 // pred_fallthru
          _
        // Predicated region
        $region81: #{tpu_custom_call.1} parent=59 // pred_check
          %p461 = pneg %p165
        $region82: #{tpu_custom_call.1} parent=59 // pred_check_branch
          %463 = sbr.rel (%p461) target = $region84
        $region83: #{tpu_custom_call.1} parent=59 // pred_region
          %464 = dma.done [#allocation16], 3072
        $region84: #{tpu_custom_call.1} parent=59 // pred_fallthru
          _
        // Predicated region
        $region85: #{tpu_custom_call.1} parent=59 // pred_check
          %p465 = pneg %p186
        $region86: #{tpu_custom_call.1} parent=59 // pred_check_branch
          %467 = sbr.rel (%p465) target = $region88
        $region87: #{tpu_custom_call.1} parent=59 // pred_region
          %468 = dma.done [#allocation16], 1024
        $region88: #{tpu_custom_call.1} parent=59 // pred_fallthru
          _
        // Predicated region
        $region89: #{tpu_custom_call.1} parent=59 // pred_check
          %p469 = pneg %p207
        $region90: #{tpu_custom_call.1} parent=59 // pred_check_branch
          %471 = sbr.rel (%p469) target = $region92
        $region91: #{tpu_custom_call.1} parent=59 // pred_region
          %472 = dma.done [#allocation19], 16
        $region92: #{tpu_custom_call.1} parent=59 // pred_fallthru
          _
        // Predicated region
        $region93: #{tpu_custom_call.1} parent=59 // pred_check
          %p473 = pneg %p228
        $region94: #{tpu_custom_call.1} parent=59 // pred_check_branch
          %475 = sbr.rel (%p473) target = $region96
        $region95: #{tpu_custom_call.1} parent=59 // pred_region
          %476 = dma.done [#allocation19], 8192
        $region96: #{tpu_custom_call.1} parent=59 // pred_fallthru
          _
        // Predicated region
        $region97: #{tpu_custom_call.1} parent=59 // pred_check
          %p477 = pneg %p249
        $region98: #{tpu_custom_call.1} parent=59 // pred_check_branch
          %479 = sbr.rel (%p477) target = $region100
        $region99: #{tpu_custom_call.1} parent=59 // pred_region
          %480 = dma.done [#allocation22], 4096
        $region100: #{tpu_custom_call.1} parent=59 // pred_fallthru
          _
        %s481 = sand.u32 %s42, 1
        %s482 = scalar_lea.sflag [#allocation7], %s481
        %s483 = sand.u32 %s42, 1
        %s484 = smul.addr %s483, 4
        %s485 = scalar_lea.vmem [#allocation6], %s484
        %p486 = pneg %p55
        %p487 = pneg %p52
        %s488 = sand.u32 %s34, 1
        %s489 = scalar_lea.sflag [#allocation10], %s488
        %s490 = sand.u32 %s68, 1
        %s491 = scalar_lea.vmem [#allocation9], %s490
        %p492 = pneg %p81
        %p493 = pneg %p78
        %p494 = pneg %p102
        %p495 = pneg %p99
        %p496 = pneg %p123
        %p497 = pneg %p120
        %p498 = pneg %p144
        %p499 = pneg %p141
        %p500 = pneg %p165
        %p501 = pneg %p162
        %p502 = pneg %p186
        %p503 = pneg %p183
        %p504 = pneg %p207
        %p505 = pneg %p204
        %p506 = pneg %p228
        %p507 = pneg %p225
        %p508 = pneg %p249
        %p509 = pneg %p246
        %p510 = pneg %p275
        %p511 = pneg %p272
        %s512 = sand.u32 %s262, 1
        %s513 = scalar_lea.sflag [#allocation8], %s512
        %s514 = sand.u32 %s262, 1
        %s515 = smul.addr %s514, 4
        %s516 = scalar_lea.vmem [#allocation23], %s515
        %v518 = vld [vmem:[%s436] sm:$0xf]
        %v519 = vunpack.c.l.bf16 %v518
        %v520 = vld [vmem:[%s444] sm:$0x1]
        %v521 = vld [vmem:[#allocation11] sm:$0xff]
        %523 = vrot.lane.b32.xlu0 %v521, 32
        %v524 = vpop.permute.xlu0 %523
        %526 = vrot.lane.b32.xlu0 %v521, 64
        %v527 = vpop.permute.xlu0 %526
        %529 = vrot.lane.b32.xlu0 %v521, 96
        %v530 = vpop.permute.xlu0 %529
        %vm532 = vcmask 261120
        %v533 = vsel %vm532, %v521, %v524
        %vm534 = vcmask 523264
        %v535 = vsel %vm534, %v533, %v527
        %vm536 = vcmask 785408
        %v537 = vsel %vm536, %v535, %v530
        %v538 = vld [vmem:[#allocation12] sm:$0xff]
        %540 = vrot.lane.b32.xlu0 %v538, 32
        %v541 = vpop.permute.xlu0 %540
        %543 = vrot.lane.b32.xlu0 %v538, 64
        %v544 = vpop.permute.xlu0 %543
        %546 = vrot.lane.b32.xlu0 %v538, 96
        %v547 = vpop.permute.xlu0 %546
        %v549 = vsel %vm532, %v538, %v541
        %v550 = vsel %vm534, %v549, %v544
        %v551 = vsel %vm536, %v550, %v547
        %v552 = vlaneseq
        %v553 = vshrl.u32 %v552, 7
        %v554 = vlaneseq
        %v555 = vand.u32 %v554, 127
        %vm556 = vcmp.gt.s32.totalorder %v555, %v553
        %v557 = vsel %vm556, -1e+30, 0.0
        %v559 = vlaneseq
        %v560 = vshrl.u32 %v559, 7
        %v561 = vsub.s32 0, %v560
        %v562 = vrot.slane %v520, %v561
        %v564 = vadd.f32 %v557, %v562
        %vm565 = vcmp.lt.s32.totalorder %v555, 0
        %v566 = vsub.s32 0, %v555
        %v567 = vsel %vm565, %v566, %v555
        %v568 = vshrl.u32 %v567, 1
        %v569 = vand.u32 %v567, 1
        %v570 = vsub.s32 0, %v569
        %v571 = vsel %vm565, %v570, %v569
        %vm572 = vcmp.ne.s32.totalorder %v571, 0
        %vm573 = vcmp.lt.s32.totalorder %v571, 0
        %vm574 = vmand %vm573, %vm572
        %v575 = vadd.s32 %v571, 2
        %v576 = vsel %vm574, %v575, %v571
        %vm577 = vcmp.eq.s32.totalorder %v576, 0
        %v578 = vld [vmem:[#allocation14] sm:$0x1]
        %v579 = vmul.f32 %v519, %v519
        %580 = vadd.xlane.f32.xlu0 %v579
        %v581 = vpop.xlane.xlu0 %580
        %v582 = vrcp.pop 128.0
        %v583 = vmul.f32 %v581, %v582
        %v584 = vadd.f32 %v583, 1e-06
        %v585 = vrsqrt.pop %v584
        %v586 = vmul.f32 %v519, %v585
        %v588 = vlaneseq
        %v589 = vshrl.u32 %v588, 7
        %v590 = vsub.s32 0, %v589
        %v591 = vrot.slane %v578, %v590
        %v593 = vmul.f32 %v586, %v591
        %v594 = vpack.c.bf16 %v593, %v593
        %v595 = vld [vmem:[#allocation15] sm:$0xff]
        %v596 = vld [vmem:[#allocation15 + $0x8] sm:$0xf]
        %v597 = vld [vmem:[#allocation15 + $0xc] sm:$0xff]
        %v598 = vld [vmem:[#allocation15 + $0x14] sm:$0xf]
        %v599 = vld [vmem:[#allocation15 + $0x18] sm:$0xff]
        %v600 = vld [vmem:[#allocation15 + $0x20] sm:$0xf]
        %v601 = vld [vmem:[#allocation15 + $0x24] sm:$0xff]
        %v602 = vld [vmem:[#allocation15 + $0x2c] sm:$0xf]
        %v603 = vld [vmem:[#allocation15 + $0x30] sm:$0xff]
        %v604 = vld [vmem:[#allocation15 + $0x38] sm:$0xf]
        %v605 = vld [vmem:[#allocation15 + $0x3c] sm:$0xff]
        %v606 = vld [vmem:[#allocation15 + $0x44] sm:$0xf]
        %v607 = vld [vmem:[#allocation15 + $0x48] sm:$0xff]
        %v608 = vld [vmem:[#allocation15 + $0x50] sm:$0xf]
        %v609 = vld [vmem:[#allocation15 + $0x54] sm:$0xff]
        %v610 = vld [vmem:[#allocation15 + $0x5c] sm:$0xf]
        %v611 = vld [vmem:[#allocation15 + $0x60] sm:$0xff]
        %v612 = vld [vmem:[#allocation15 + $0x68] sm:$0xf]
        %v613 = vld [vmem:[#allocation15 + $0x6c] sm:$0xff]
        %v614 = vld [vmem:[#allocation15 + $0x74] sm:$0xf]
        %v615 = vld [vmem:[#allocation15 + $0x78] sm:$0xff]
        %v616 = vld [vmem:[#allocation15 + $0x80] sm:$0xf]
        %v617 = vld [vmem:[#allocation15 + $0x84] sm:$0xff]
        %v618 = vld [vmem:[#allocation15 + $0x8c] sm:$0xf]
        %v619 = vld [vmem:[#allocation15 + $0x90] sm:$0xff]
        %v620 = vld [vmem:[#allocation15 + $0x98] sm:$0xf]
        %v621 = vld [vmem:[#allocation15 + $0x9c] sm:$0xff]
        %v622 = vld [vmem:[#allocation15 + $0xa4] sm:$0xf]
        %v623 = vld [vmem:[#allocation15 + $0xa8] sm:$0xff]
        %v624 = vld [vmem:[#allocation15 + $0xb0] sm:$0xf]
        %v625 = vld [vmem:[#allocation15 + $0xb4] sm:$0xff]
        %v626 = vld [vmem:[#allocation15 + $0xbc] sm:$0xf]
        %v659 = vunpack.c.l.b16 %v595
        %v660 = vunpack.c.h.b16 %v595
        %v661 = vunpack.c.l.b16 %v596
        %v662 = vunpack.c.l.b16 %v597
        %v663 = vunpack.c.h.b16 %v597
        %v664 = vunpack.c.l.b16 %v598
        %v665 = vunpack.c.l.b16 %v599
        %v666 = vunpack.c.h.b16 %v599
        %v667 = vunpack.c.l.b16 %v600
        %v668 = vunpack.c.l.b16 %v601
        %v669 = vunpack.c.h.b16 %v601
        %v670 = vunpack.c.l.b16 %v602
        %v671 = vunpack.c.l.b16 %v603
        %v672 = vunpack.c.h.b16 %v603
        %v673 = vunpack.c.l.b16 %v604
        %v674 = vunpack.c.l.b16 %v605
        %v675 = vunpack.c.h.b16 %v605
        %v676 = vunpack.c.l.b16 %v606
        %v677 = vunpack.c.l.b16 %v607
        %v678 = vunpack.c.h.b16 %v607
        %v679 = vunpack.c.l.b16 %v608
        %v680 = vunpack.c.l.b16 %v609
        %v681 = vunpack.c.h.b16 %v609
        %v682 = vunpack.c.l.b16 %v610
        %v683 = vunpack.c.l.b16 %v611
        %v684 = vunpack.c.h.b16 %v611
        %v685 = vunpack.c.l.b16 %v612
        %v686 = vunpack.c.l.b16 %v613
        %v687 = vunpack.c.h.b16 %v613
        %v688 = vunpack.c.l.b16 %v614
        %v689 = vunpack.c.l.b16 %v615
        %v690 = vunpack.c.h.b16 %v615
        %v691 = vunpack.c.l.b16 %v616
        %v692 = vunpack.c.l.b16 %v617
        %v693 = vunpack.c.h.b16 %v617
        %v694 = vunpack.c.l.b16 %v618
        %v695 = vunpack.c.l.b16 %v619
        %v696 = vunpack.c.h.b16 %v619
        %v697 = vunpack.c.l.b16 %v620
        %v698 = vunpack.c.l.b16 %v621
        %v699 = vunpack.c.h.b16 %v621
        %v700 = vunpack.c.l.b16 %v622
        %v701 = vunpack.c.l.b16 %v623
        %v702 = vunpack.c.h.b16 %v623
        %v703 = vunpack.c.l.b16 %v624
        %v704 = vunpack.c.l.b16 %v625
        %v705 = vunpack.c.h.b16 %v625
        %v706 = vunpack.c.l.b16 %v626
        %v707 = vpack.c.b16 %v662, %v659
        %v708 = vpack.c.b16 %v663, %v660
        %v709 = vpack.c.b16 %v664, %v661
        %v710 = vpack.c.b16 %v668, %v665
        %v711 = vpack.c.b16 %v669, %v666
        %v712 = vpack.c.b16 %v670, %v667
        %v713 = vpack.c.b16 %v674, %v671
        %v714 = vpack.c.b16 %v675, %v672
        %v715 = vpack.c.b16 %v676, %v673
        %v716 = vpack.c.b16 %v680, %v677
        %v717 = vpack.c.b16 %v681, %v678
        %v718 = vpack.c.b16 %v682, %v679
        %v719 = vpack.c.b16 %v686, %v683
        %v720 = vpack.c.b16 %v687, %v684
        %v721 = vpack.c.b16 %v688, %v685
        %v722 = vpack.c.b16 %v692, %v689
        %v723 = vpack.c.b16 %v693, %v690
        %v724 = vpack.c.b16 %v694, %v691
        %v725 = vpack.c.b16 %v698, %v695
        %v726 = vpack.c.b16 %v699, %v696
        %v727 = vpack.c.b16 %v700, %v697
        %v728 = vpack.c.b16 %v704, %v701
        %v729 = vpack.c.b16 %v705, %v702
        %v730 = vpack.c.b16 %v706, %v703
        %755 = vmatprep.subr.bf16.mxu0 %v708
        %756 = vmatpush1.bf16.msra.mxu0 %v707
        %757 = vmatprep.subr.bf16.mxu0 %v711
        %758 = vmatpush1.bf16.msra.mxu0 %v710
        %759 = vmatprep.subr.bf16.mxu0 %v714
        %760 = vmatpush1.bf16.msra.mxu0 %v713
        %761 = vmatprep.subr.bf16.mxu0 %v717
        %762 = vmatpush1.bf16.msra.mxu0 %v716
        %763 = vmatprep.subr.bf16.mxu0 %v720
        %764 = vmatpush1.bf16.msra.mxu0 %v719
        %765 = vmatprep.subr.bf16.mxu0 %v723
        %766 = vmatpush1.bf16.msra.mxu0 %v722
        %767 = vmatprep.subr.bf16.mxu0 %v726
        %768 = vmatpush1.bf16.msra.mxu0 %v725
        %769 = vmatprep.subr.bf16.mxu0 %v729
        %770 = vmatpush1.bf16.msra.mxu0 %v728
        %771 = vmatprep.subr.bf16.mxu0 0
        %772 = vmatpush1.bf16.msra.mxu0 0
        %773 = vmatprep.subr.bf16.mxu0 0
        %774 = vmatpush1.bf16.msra.mxu0 0
        %775 = vmatprep.subr.bf16.mxu0 0
        %776 = vmatpush1.bf16.msra.mxu0 0
        %777 = vmatprep.subr.bf16.mxu0 0
        %778 = vmatpush1.bf16.msra.mxu0 0
        %779 = vmatprep.subr.bf16.mxu0 0
        %780 = vmatpush1.bf16.msra.mxu0 0
        %781 = vmatprep.subr.bf16.mxu0 0
        %782 = vmatpush1.bf16.msra.mxu0 0
        %783 = vmatprep.subr.bf16.mxu0 0
        %784 = vmatpush1.bf16.msra.mxu0 0
        %785 = vmatprep.subr.bf16.mxu0 0
        %786 = vmatpush1.bf16.msra.mxu0 0
        %787 = vmatprep.mubr.bf16.mxu0 0
        %788 = vmatmul.mubr.bf16.gmra.mrb[0].mxu0 %v594
        %v789 = vpop.f32.mrb[0].mxu0
        %v790 = vadd.f32 0.0, %v789
        %v791 = vpop.f32.mrb[0].mxu0
        %v792 = vadd.f32 0.0, %v791
        %v793 = vpop.f32.mrb[0].mxu0
        %v794 = vpop.f32.mrb[0].mxu0
        %795 = vdwg.mxu0
        %796 = vmatprep.subr.bf16.mxu0 0
        %797 = vmatpush1.bf16.msra.mxu0 %v709
        %798 = vmatprep.subr.bf16.mxu0 0
        %799 = vmatpush1.bf16.msra.mxu0 %v712
        %800 = vmatprep.subr.bf16.mxu0 0
        %801 = vmatpush1.bf16.msra.mxu0 %v715
        %802 = vmatprep.subr.bf16.mxu0 0
        %803 = vmatpush1.bf16.msra.mxu0 %v718
        %804 = vmatprep.subr.bf16.mxu0 0
        %805 = vmatpush1.bf16.msra.mxu0 %v721
        %806 = vmatprep.subr.bf16.mxu0 0
        %807 = vmatpush1.bf16.msra.mxu0 %v724
        %808 = vmatprep.subr.bf16.mxu0 0
        %809 = vmatpush1.bf16.msra.mxu0 %v727
        %810 = vmatprep.subr.bf16.mxu0 0
        %811 = vmatpush1.bf16.msra.mxu0 %v730
        %812 = vmatprep.subr.bf16.mxu0 0
        %813 = vmatpush1.bf16.msra.mxu0 0
        %814 = vmatprep.subr.bf16.mxu0 0
        %815 = vmatpush1.bf16.msra.mxu0 0
        %816 = vmatprep.subr.bf16.mxu0 0
        %817 = vmatpush1.bf16.msra.mxu0 0
        %818 = vmatprep.subr.bf16.mxu0 0
        %819 = vmatpush1.bf16.msra.mxu0 0
        %820 = vmatprep.subr.bf16.mxu0 0
        %821 = vmatpush1.bf16.msra.mxu0 0
        %822 = vmatprep.subr.bf16.mxu0 0
        %823 = vmatpush1.bf16.msra.mxu0 0
        %824 = vmatprep.subr.bf16.mxu0 0
        %825 = vmatpush1.bf16.msra.mxu0 0
        %826 = vmatprep.subr.bf16.mxu0 0
        %827 = vmatpush1.bf16.msra.mxu0 0
        %828 = vmatprep.mubr.bf16.mxu0 0
        %829 = vmatmul.mubr.bf16.gmra.mrb[0].mxu0 %v594
        %v830 = vpop.f32.mrb[0].mxu0
        %v831 = vadd.f32 0.0, %v830
        %v832 = vpop.f32.mrb[0].mxu0
        %v833 = vpop.f32.mrb[0].mxu0
        %v834 = vpop.f32.mrb[0].mxu0
        %835 = vdwg.mxu0
        %836 = vrot.lane.b32.xlu0 %v790, 127
        %v837 = vpop.permute.xlu0 %836
        %838 = vrot.lane.b32.xlu0 %v790, 1
        %v839 = vpop.permute.xlu0 %838
        %v840 = vsel %vm577, %v837, %v839
        %v841 = vmul.f32 %v790, %v537
        %v842 = vmul.f32 %v840, %v551
        %v843 = vadd.f32 %v841, %v842
        %844 = vrot.lane.b32.xlu0 %v792, 127
        %v845 = vpop.permute.xlu0 %844
        %846 = vrot.lane.b32.xlu0 %v792, 1
        %v847 = vpop.permute.xlu0 %846
        %v848 = vsel %vm577, %v845, %v847
        %v849 = vmul.f32 %v792, %v537
        %v850 = vmul.f32 %v848, %v551
        %v851 = vadd.f32 %v849, %v850
        %v852 = vpack.c.bf16 %v843, %v843
        %vm853 = vcmask 257024
        %854 = vst.msk [vmem:[#allocation2] sm:$0xf] %vm853, %v852
        %v855 = vpack.c.bf16 %v851, %v851
        %856 = vst.msk [vmem:[#allocation3] sm:$0xf] %vm853, %v855
        %v857 = vpack.c.bf16 %v831, %v831
        %858 = vst.msk [vmem:[#allocation4] sm:$0xf] %vm853, %v857
        %v860 = vunpack.c.l.b16 %v852
        %v861 = vpack.c.b16 %v860, %v860
        %862 = vrot.lane.b32.xlu0 %v861, 96
        %v863 = vpop.permute.xlu0 %862
        %s865 = scalar_lea.vmem [#allocation2], 4
        %866 = vst.msk [vmem:[%s865] sm:$0xf] %vm853, %v863
        %v868 = vunpack.c.l.b16 %v855
        %v869 = vpack.c.b16 %v868, %v868
        %870 = vrot.lane.b32.xlu0 %v869, 96
        %v871 = vpop.permute.xlu0 %870
        %s873 = scalar_lea.vmem [#allocation3], 4
        %874 = vst.msk [vmem:[%s873] sm:$0xf] %vm853, %v871
        %v876 = vunpack.c.l.b16 %v857
        %v877 = vpack.c.b16 %v876, %v876
        %878 = vrot.lane.b32.xlu0 %v877, 96
        %v879 = vpop.permute.xlu0 %878
        %s881 = scalar_lea.vmem [#allocation4], 4
        %882 = vst.msk [vmem:[%s881] sm:$0xf] %vm853, %v879
        %883 = vrot.lane.b32.xlu0 %v861, 64
        %v884 = vpop.permute.xlu0 %883
        %s886 = scalar_lea.vmem [#allocation2], 8
        %887 = vst.msk [vmem:[%s886] sm:$0xf] %vm853, %v884
        %888 = vrot.lane.b32.xlu0 %v869, 64
        %v889 = vpop.permute.xlu0 %888
        %s891 = scalar_lea.vmem [#allocation3], 8
        %892 = vst.msk [vmem:[%s891] sm:$0xf] %vm853, %v889
        %893 = vrot.lane.b32.xlu0 %v877, 64
        %v894 = vpop.permute.xlu0 %893
        %s896 = scalar_lea.vmem [#allocation4], 8
        %897 = vst.msk [vmem:[%s896] sm:$0xf] %vm853, %v894
        %898 = vrot.lane.b32.xlu0 %v861, 32
        %v899 = vpop.permute.xlu0 %898
        %s901 = scalar_lea.vmem [#allocation2], 12
        %902 = vst.msk [vmem:[%s901] sm:$0xf] %vm853, %v899
        %903 = vrot.lane.b32.xlu0 %v869, 32
        %v904 = vpop.permute.xlu0 %903
        %s906 = scalar_lea.vmem [#allocation3], 12
        %907 = vst.msk [vmem:[%s906] sm:$0xf] %vm853, %v904
        %908 = vrot.lane.b32.xlu0 %v877, 32
        %v909 = vpop.permute.xlu0 %908
        %s911 = scalar_lea.vmem [#allocation4], 12
        %912 = vst.msk [vmem:[%s911] sm:$0xf] %vm853, %v909
        loop: start=0, step=1, limit=4
        $region101: #{tpu_custom_call.1} parent=59 // loop_pre_header
          _
        $region102: #{tpu_custom_call.1} parent=59 // loop_header
          %s914 = sphi 0, %s918
          %p915 = scmp.ge.s32.totalorder %s914, 4
        $region103: #{tpu_custom_call.1} parent=59 // loop_header_branch
          %917 = sbr.rel (%p915) target = $region107
        $region104: #{tpu_custom_call.1} parent=59 // loop_body
          %s919 = smul.addr %s914, 4
          %s920 = scalar_lea.vmem [#allocation2], %s919
          %v921 = vld [vmem:[%s920] sm:$0xf]
          %s922 = smul.addr %s914, 4
          %s923 = scalar_lea.vmem [#allocation3], %s922
          %v924 = vld [vmem:[%s923] sm:$0xf]
          %v926 = vsel %vm532, %v921, 0
          %v929 = vsel %vm532, %v924, 0
          %931 = vmatprep.subr.bf16.mxu0 0
          %932 = vmatpush1.bf16.xpose.msra.mxu0 %v929
          %933 = vmatprep.subr.bf16.mxu0 0
          %934 = vmatpush1.bf16.xpose.msra.mxu0 0
          %935 = vmatprep.subr.bf16.mxu0 0
          %936 = vmatpush1.bf16.xpose.msra.mxu0 0
          %937 = vmatprep.subr.bf16.mxu0 0
          %938 = vmatpush1.bf16.xpose.msra.mxu0 0
          %939 = vmatprep.subr.bf16.mxu0 0
          %940 = vmatpush1.bf16.xpose.msra.mxu0 0
          %941 = vmatprep.subr.bf16.mxu0 0
          %942 = vmatpush1.bf16.xpose.msra.mxu0 0
          %943 = vmatprep.subr.bf16.mxu0 0
          %944 = vmatpush1.bf16.xpose.msra.mxu0 0
          %945 = vmatprep.subr.bf16.mxu0 0
          %946 = vmatpush1.bf16.xpose.msra.mxu0 0
          %947 = vmatprep.subr.bf16.mxu0 0
          %948 = vmatpush1.bf16.xpose.msra.mxu0 0
          %949 = vmatprep.subr.bf16.mxu0 0
          %950 = vmatpush1.bf16.xpose.msra.mxu0 0
          %951 = vmatprep.subr.bf16.mxu0 0
          %952 = vmatpush1.bf16.xpose.msra.mxu0 0
          %953 = vmatprep.subr.bf16.mxu0 0
          %954 = vmatpush1.bf16.xpose.msra.mxu0 0
          %955 = vmatprep.subr.bf16.mxu0 0
          %956 = vmatpush1.bf16.xpose.msra.mxu0 0
          %957 = vmatprep.subr.bf16.mxu0 0
          %958 = vmatpush1.bf16.xpose.msra.mxu0 0
          %959 = vmatprep.subr.bf16.mxu0 0
          %960 = vmatpush1.bf16.xpose.msra.mxu0 0
          %961 = vmatprep.subr.bf16.mxu0 0
          %962 = vmatpush1.bf16.xpose.msra.mxu0 0
          %963 = vmatprep.mubr.bf16.mxu0 0
          %964 = vmatmul.mubr.bf16.gmra.mrb[0].mxu0 %v926
          %v965 = vpop.f32.mrb[0].mxu0
          %v966 = vadd.f32 %v564, %v965
          %v967 = vpop.f32.mrb[0].mxu0
          %v968 = vpop.f32.mrb[0].mxu0
          %v969 = vpop.f32.mrb[0].mxu0
          %970 = vdwg.mxu0
          %vm971 = vcmask 64512
          %v972 = vsel %vm971, %v966, -inf
          %973 = vmax.xlane.f32.xlu0 %v972
          %v974 = vpop.xlane.xlu0 %973
          %v975 = vsub.f32 %v966, %v974
          %v976 = vmul.f32 %v975, 1.442695
          %v977 = vpow.pop %v976
          %v978 = vsel %vm971, %v977, 0.0
          %979 = vadd.xlane.f32.xlu0 %v978
          %v980 = vpop.xlane.xlu0 %979
          %v981 = vrcp.pop %v980
          %v982 = vmul.f32 %v977, %v981
          %v983 = vpack.c.bf16 %v982, %v982
          %s984 = smul.addr %s914, 4
          %s985 = scalar_lea.vmem [#allocation4], %s984
          %v986 = vld [vmem:[%s985] sm:$0xf]
          %v988 = vsel %vm971, %v983, 0
          %vm990 = vcmask 1043456
          %v992 = vsel %vm990, %v986, 0
          %994 = vmatprep.subr.bf16.mxu0 0
          %995 = vmatpush1.bf16.msra.mxu0 %v992
          %996 = vmatprep.subr.bf16.mxu0 0
          %997 = vmatpush1.bf16.msra.mxu0 0
          %998 = vmatprep.subr.bf16.mxu0 0
          %999 = vmatpush1.bf16.msra.mxu0 0
          %1000 = vmatprep.subr.bf16.mxu0 0
          %1001 = vmatpush1.bf16.msra.mxu0 0
          %1002 = vmatprep.subr.bf16.mxu0 0
          %1003 = vmatpush1.bf16.msra.mxu0 0
          %1004 = vmatprep.subr.bf16.mxu0 0
          %1005 = vmatpush1.bf16.msra.mxu0 0
          %1006 = vmatprep.subr.bf16.mxu0 0
          %1007 = vmatpush1.bf16.msra.mxu0 0
          %1008 = vmatprep.subr.bf16.mxu0 0
          %1009 = vmatpush1.bf16.msra.mxu0 0
          %1010 = vmatprep.subr.bf16.mxu0 0
          %1011 = vmatpush1.bf16.msra.mxu0 0
          %1012 = vmatprep.subr.bf16.mxu0 0
          %1013 = vmatpush1.bf16.msra.mxu0 0
          %1014 = vmatprep.subr.bf16.mxu0 0
          %1015 = vmatpush1.bf16.msra.mxu0 0
          %1016 = vmatprep.subr.bf16.mxu0 0
          %1017 = vmatpush1.bf16.msra.mxu0 0
          %1018 = vmatprep.subr.bf16.mxu0 0
          %1019 = vmatpush1.bf16.msra.mxu0 0
          %1020 = vmatprep.subr.bf16.mxu0 0
          %1021 = vmatpush1.bf16.msra.mxu0 0
          %1022 = vmatprep.subr.bf16.mxu0 0
          %1023 = vmatpush1.bf16.msra.mxu0 0
          %1024 = vmatprep.subr.bf16.mxu0 0
          %1025 = vmatpush1.bf16.msra.mxu0 0
          %1026 = vmatprep.mubr.bf16.mxu0 0
          %1027 = vmatmul.mubr.bf16.gmra.mrb[0].mxu0 %v988
          %v1028 = vpop.f32.mrb[0].mxu0
          %v1029 = vadd.f32 0.0, %v1028
          %v1030 = vpop.f32.mrb[0].mxu0
          %v1031 = vpop.f32.mrb[0].mxu0
          %v1032 = vpop.f32.mrb[0].mxu0
          %1033 = vdwg.mxu0
          %v1034 = vpack.c.bf16 %v1029, %v1029
          %s1035 = smul.addr %s914, 4
          %s1036 = scalar_lea.vmem [#allocation5], %s1035
          %1037 = vst.msk [vmem:[%s1036] sm:$0xf] %vm853, %v1034
        $region105: #{tpu_custom_call.1} parent=59 // loop_footer
          %s918 = sadd.s32 1, %s914
        $region106: #{tpu_custom_call.1} parent=59 // loop_footer_branch
          %913 = sbr.rel target = $region102
        $region107: #{tpu_custom_call.1} parent=59 // loop_exit
          _
        %v1038 = vld [vmem:[#allocation5] sm:$0xf]
        %s1039 = scalar_lea.vmem [#allocation5], 4
        %v1040 = vld [vmem:[%s1039] sm:$0xf]
        %s1041 = scalar_lea.vmem [#allocation5], 8
        %v1042 = vld [vmem:[%s1041] sm:$0xf]
        %s1043 = scalar_lea.vmem [#allocation5], 12
        %v1044 = vld [vmem:[%s1043] sm:$0xf]
        %v1046 = vunpack.c.l.b16 %v1040
        %v1047 = vpack.c.b16 %v1046, %v1046
        %1048 = vrot.lane.b32.xlu0 %v1047, 32
        %v1049 = vpop.permute.xlu0 %1048
        %v1051 = vunpack.c.l.b16 %v1042
        %v1052 = vpack.c.b16 %v1051, %v1051
        %1053 = vrot.lane.b32.xlu0 %v1052, 64
        %v1054 = vpop.permute.xlu0 %1053
        %v1056 = vunpack.c.l.b16 %v1044
        %v1057 = vpack.c.b16 %v1056, %v1056
        %1058 = vrot.lane.b32.xlu0 %v1057, 96
        %v1059 = vpop.permute.xlu0 %1058
        %v1062 = vsel %vm532, %v1038, %v1049
        %v1064 = vsel %vm534, %v1062, %v1054
        %v1066 = vsel %vm536, %v1064, %v1059
        %v1068 = vld [vmem:[#allocation17] sm:$0xf]
        %v1069 = vld [vmem:[#allocation17 + $0x4] sm:$0xf]
        %v1070 = vld [vmem:[#allocation17 + $0x8] sm:$0xf]
        %v1071 = vld [vmem:[#allocation17 + $0xc] sm:$0xf]
        %v1072 = vld [vmem:[#allocation17 + $0x10] sm:$0xf]
        %v1073 = vld [vmem:[#allocation17 + $0x14] sm:$0xf]
        %v1074 = vld [vmem:[#allocation17 + $0x18] sm:$0xf]
        %v1075 = vld [vmem:[#allocation17 + $0x1c] sm:$0xf]
        %v1076 = vld [vmem:[#allocation17 + $0x20] sm:$0xf]
        %v1077 = vld [vmem:[#allocation17 + $0x24] sm:$0xf]
        %v1078 = vld [vmem:[#allocation17 + $0x28] sm:$0xf]
        %v1079 = vld [vmem:[#allocation17 + $0x2c] sm:$0xf]
        %v1080 = vld [vmem:[#allocation17 + $0x30] sm:$0xf]
        %v1081 = vld [vmem:[#allocation17 + $0x34] sm:$0xf]
        %v1082 = vld [vmem:[#allocation17 + $0x38] sm:$0xf]
        %v1083 = vld [vmem:[#allocation17 + $0x3c] sm:$0xf]
        %v1100 = vunpack.c.l.b16 %v1068
        %v1101 = vunpack.c.l.b16 %v1069
        %v1102 = vunpack.c.l.b16 %v1070
        %v1103 = vunpack.c.l.b16 %v1071
        %v1104 = vunpack.c.l.b16 %v1072
        %v1105 = vunpack.c.l.b16 %v1073
        %v1106 = vunpack.c.l.b16 %v1074
        %v1107 = vunpack.c.l.b16 %v1075
        %v1108 = vunpack.c.l.b16 %v1076
        %v1109 = vunpack.c.l.b16 %v1077
        %v1110 = vunpack.c.l.b16 %v1078
        %v1111 = vunpack.c.l.b16 %v1079
        %v1112 = vunpack.c.l.b16 %v1080
        %v1113 = vunpack.c.l.b16 %v1081
        %v1114 = vunpack.c.l.b16 %v1082
        %v1115 = vunpack.c.l.b16 %v1083
        %v1116 = vpack.c.b16 %v1101, %v1100
        %v1117 = vpack.c.b16 %v1103, %v1102
        %v1118 = vpack.c.b16 %v1105, %v1104
        %v1119 = vpack.c.b16 %v1107, %v1106
        %v1120 = vpack.c.b16 %v1109, %v1108
        %v1121 = vpack.c.b16 %v1111, %v1110
        %v1122 = vpack.c.b16 %v1113, %v1112
        %v1123 = vpack.c.b16 %v1115, %v1114
        %1132 = vmatprep.subr.bf16.mxu0 0
        %1133 = vmatpush1.bf16.msra.mxu0 %v1116
        %1134 = vmatprep.subr.bf16.mxu0 0
        %1135 = vmatpush1.bf16.msra.mxu0 %v1117
        %1136 = vmatprep.subr.bf16.mxu0 0
        %1137 = vmatpush1.bf16.msra.mxu0 %v1118
        %1138 = vmatprep.subr.bf16.mxu0 0
        %1139 = vmatpush1.bf16.msra.mxu0 %v1119
        %1140 = vmatprep.subr.bf16.mxu0 0
        %1141 = vmatpush1.bf16.msra.mxu0 %v1120
        %1142 = vmatprep.subr.bf16.mxu0 0
        %1143 = vmatpush1.bf16.msra.mxu0 %v1121
        %1144 = vmatprep.subr.bf16.mxu0 0
        %1145 = vmatpush1.bf16.msra.mxu0 %v1122
        %1146 = vmatprep.subr.bf16.mxu0 0
        %1147 = vmatpush1.bf16.msra.mxu0 %v1123
        %1148 = vmatprep.subr.bf16.mxu0 0
        %1149 = vmatpush1.bf16.msra.mxu0 0
        %1150 = vmatprep.subr.bf16.mxu0 0
        %1151 = vmatpush1.bf16.msra.mxu0 0
        %1152 = vmatprep.subr.bf16.mxu0 0
        %1153 = vmatpush1.bf16.msra.mxu0 0
        %1154 = vmatprep.subr.bf16.mxu0 0
        %1155 = vmatpush1.bf16.msra.mxu0 0
        %1156 = vmatprep.subr.bf16.mxu0 0
        %1157 = vmatpush1.bf16.msra.mxu0 0
        %1158 = vmatprep.subr.bf16.mxu0 0
        %1159 = vmatpush1.bf16.msra.mxu0 0
        %1160 = vmatprep.subr.bf16.mxu0 0
        %1161 = vmatpush1.bf16.msra.mxu0 0
        %1162 = vmatprep.subr.bf16.mxu0 0
        %1163 = vmatpush1.bf16.msra.mxu0 0
        %1164 = vmatprep.mubr.bf16.mxu0 0
        %1165 = vmatmul.mubr.bf16.gmra.mrb[0].mxu0 %v1066
        %v1166 = vpop.f32.mrb[0].mxu0
        %v1167 = vadd.f32 0.0, %v1166
        %v1168 = vpop.f32.mrb[0].mxu0
        %v1169 = vpop.f32.mrb[0].mxu0
        %v1170 = vpop.f32.mrb[0].mxu0
        %1171 = vdwg.mxu0
        %v1172 = vadd.f32 %v519, %v1167
        %v1173 = vld [vmem:[#allocation18] sm:$0x1]
        %v1174 = vmul.f32 %v1172, %v1172
        %1175 = vadd.xlane.f32.xlu0 %v1174
        %v1176 = vpop.xlane.xlu0 %1175
        %v1177 = vmul.f32 %v1176, %v582
        %v1178 = vadd.f32 %v1177, 1e-06
        %v1179 = vrsqrt.pop %v1178
        %v1180 = vmul.f32 %v1172, %v1179
        %v1182 = vlaneseq
        %v1183 = vshrl.u32 %v1182, 7
        %v1184 = vsub.s32 0, %v1183
        %v1185 = vrot.slane %v1173, %v1184
        %v1187 = vmul.f32 %v1180, %v1185
        %v1188 = vpack.c.bf16 %v1187, %v1187
        %v1189 = vld [vmem:[#allocation20] sm:$0xff]
        %v1190 = vld [vmem:[#allocation20 + $0x8] sm:$0xff]
        %v1191 = vld [vmem:[#allocation20 + $0x10] sm:$0xff]
        %v1192 = vld [vmem:[#allocation20 + $0x18] sm:$0xff]
        %v1193 = vld [vmem:[#allocation20 + $0x20] sm:$0xff]
        %v1194 = vld [vmem:[#allocation20 + $0x28] sm:$0xff]
        %v1195 = vld [vmem:[#allocation20 + $0x30] sm:$0xff]
        %v1196 = vld [vmem:[#allocation20 + $0x38] sm:$0xff]
        %v1197 = vld [vmem:[#allocation20 + $0x40] sm:$0xff]
        %v1198 = vld [vmem:[#allocation20 + $0x48] sm:$0xff]
        %v1199 = vld [vmem:[#allocation20 + $0x50] sm:$0xff]
        %v1200 = vld [vmem:[#allocation20 + $0x58] sm:$0xff]
        %v1201 = vld [vmem:[#allocation20 + $0x60] sm:$0xff]
        %v1202 = vld [vmem:[#allocation20 + $0x68] sm:$0xff]
        %v1203 = vld [vmem:[#allocation20 + $0x70] sm:$0xff]
        %v1204 = vld [vmem:[#allocation20 + $0x78] sm:$0xff]
        %v1205 = vld [vmem:[#allocation20 + $0x80] sm:$0xff]
        %v1206 = vld [vmem:[#allocation20 + $0x88] sm:$0xff]
        %v1207 = vld [vmem:[#allocation20 + $0x90] sm:$0xff]
        %v1208 = vld [vmem:[#allocation20 + $0x98] sm:$0xff]
        %v1209 = vld [vmem:[#allocation20 + $0xa0] sm:$0xff]
        %v1210 = vld [vmem:[#allocation20 + $0xa8] sm:$0xff]
        %v1211 = vld [vmem:[#allocation20 + $0xb0] sm:$0xff]
        %v1212 = vld [vmem:[#allocation20 + $0xb8] sm:$0xff]
        %v1213 = vld [vmem:[#allocation20 + $0xc0] sm:$0xff]
        %v1214 = vld [vmem:[#allocation20 + $0xc8] sm:$0xff]
        %v1215 = vld [vmem:[#allocation20 + $0xd0] sm:$0xff]
        %v1216 = vld [vmem:[#allocation20 + $0xd8] sm:$0xff]
        %v1217 = vld [vmem:[#allocation20 + $0xe0] sm:$0xff]
        %v1218 = vld [vmem:[#allocation20 + $0xe8] sm:$0xff]
        %v1219 = vld [vmem:[#allocation20 + $0xf0] sm:$0xff]
        %v1220 = vld [vmem:[#allocation20 + $0xf8] sm:$0xff]
        %v1221 = vld [vmem:[#allocation20 + $0x100] sm:$0xff]
        %v1222 = vld [vmem:[#allocation20 + $0x108] sm:$0xff]
        %v1223 = vld [vmem:[#allocation20 + $0x110] sm:$0xff]
        %v1224 = vld [vmem:[#allocation20 + $0x118] sm:$0xff]
        %v1225 = vld [vmem:[#allocation20 + $0x120] sm:$0xff]
        %v1226 = vld [vmem:[#allocation20 + $0x128] sm:$0xff]
        %v1227 = vld [vmem:[#allocation20 + $0x130] sm:$0xff]
        %v1228 = vld [vmem:[#allocation20 + $0x138] sm:$0xff]
        %v1229 = vld [vmem:[#allocation20 + $0x140] sm:$0xff]
        %v1230 = vld [vmem:[#allocation20 + $0x148] sm:$0xff]
        %v1231 = vld [vmem:[#allocation20 + $0x150] sm:$0xff]
        %v1232 = vld [vmem:[#allocation20 + $0x158] sm:$0xff]
        %v1233 = vld [vmem:[#allocation20 + $0x160] sm:$0xff]
        %v1234 = vld [vmem:[#allocation20 + $0x168] sm:$0xff]
        %v1235 = vld [vmem:[#allocation20 + $0x170] sm:$0xff]
        %v1236 = vld [vmem:[#allocation20 + $0x178] sm:$0xff]
        %v1237 = vld [vmem:[#allocation20 + $0x180] sm:$0xff]
        %v1238 = vld [vmem:[#allocation20 + $0x188] sm:$0xff]
        %v1239 = vld [vmem:[#allocation20 + $0x190] sm:$0xff]
        %v1240 = vld [vmem:[#allocation20 + $0x198] sm:$0xff]
        %v1241 = vld [vmem:[#allocation20 + $0x1a0] sm:$0xff]
        %v1242 = vld [vmem:[#allocation20 + $0x1a8] sm:$0xff]
        %v1243 = vld [vmem:[#allocation20 + $0x1b0] sm:$0xff]
        %v1244 = vld [vmem:[#allocation20 + $0x1b8] sm:$0xff]
        %v1245 = vld [vmem:[#allocation20 + $0x1c0] sm:$0xff]
        %v1246 = vld [vmem:[#allocation20 + $0x1c8] sm:$0xff]
        %v1247 = vld [vmem:[#allocation20 + $0x1d0] sm:$0xff]
        %v1248 = vld [vmem:[#allocation20 + $0x1d8] sm:$0xff]
        %v1249 = vld [vmem:[#allocation20 + $0x1e0] sm:$0xff]
        %v1250 = vld [vmem:[#allocation20 + $0x1e8] sm:$0xff]
        %v1251 = vld [vmem:[#allocation20 + $0x1f0] sm:$0xff]
        %v1252 = vld [vmem:[#allocation20 + $0x1f8] sm:$0xff]
        %v1317 = vunpack.c.l.b16 %v1189
        %v1318 = vunpack.c.h.b16 %v1189
        %v1319 = vunpack.c.l.b16 %v1190
        %v1320 = vunpack.c.h.b16 %v1190
        %v1321 = vunpack.c.l.b16 %v1191
        %v1322 = vunpack.c.h.b16 %v1191
        %v1323 = vunpack.c.l.b16 %v1192
        %v1324 = vunpack.c.h.b16 %v1192
        %v1325 = vunpack.c.l.b16 %v1193
        %v1326 = vunpack.c.h.b16 %v1193
        %v1327 = vunpack.c.l.b16 %v1194
        %v1328 = vunpack.c.h.b16 %v1194
        %v1329 = vunpack.c.l.b16 %v1195
        %v1330 = vunpack.c.h.b16 %v1195
        %v1331 = vunpack.c.l.b16 %v1196
        %v1332 = vunpack.c.h.b16 %v1196
        %v1333 = vunpack.c.l.b16 %v1197
        %v1334 = vunpack.c.h.b16 %v1197
        %v1335 = vunpack.c.l.b16 %v1198
        %v1336 = vunpack.c.h.b16 %v1198
        %v1337 = vunpack.c.l.b16 %v1199
        %v1338 = vunpack.c.h.b16 %v1199
        %v1339 = vunpack.c.l.b16 %v1200
        %v1340 = vunpack.c.h.b16 %v1200
        %v1341 = vunpack.c.l.b16 %v1201
        %v1342 = vunpack.c.h.b16 %v1201
        %v1343 = vunpack.c.l.b16 %v1202
        %v1344 = vunpack.c.h.b16 %v1202
        %v1345 = vunpack.c.l.b16 %v1203
        %v1346 = vunpack.c.h.b16 %v1203
        %v1347 = vunpack.c.l.b16 %v1204
        %v1348 = vunpack.c.h.b16 %v1204
        %v1349 = vunpack.c.l.b16 %v1205
        %v1350 = vunpack.c.h.b16 %v1205
        %v1351 = vunpack.c.l.b16 %v1206
        %v1352 = vunpack.c.h.b16 %v1206
        %v1353 = vunpack.c.l.b16 %v1207
        %v1354 = vunpack.c.h.b16 %v1207
        %v1355 = vunpack.c.l.b16 %v1208
        %v1356 = vunpack.c.h.b16 %v1208
        %v1357 = vunpack.c.l.b16 %v1209
        %v1358 = vunpack.c.h.b16 %v1209
        %v1359 = vunpack.c.l.b16 %v1210
        %v1360 = vunpack.c.h.b16 %v1210
        %v1361 = vunpack.c.l.b16 %v1211
        %v1362 = vunpack.c.h.b16 %v1211
        %v1363 = vunpack.c.l.b16 %v1212
        %v1364 = vunpack.c.h.b16 %v1212
        %v1365 = vunpack.c.l.b16 %v1213
        %v1366 = vunpack.c.h.b16 %v1213
        %v1367 = vunpack.c.l.b16 %v1214
        %v1368 = vunpack.c.h.b16 %v1214
        %v1369 = vunpack.c.l.b16 %v1215
        %v1370 = vunpack.c.h.b16 %v1215
        %v1371 = vunpack.c.l.b16 %v1216
        %v1372 = vunpack.c.h.b16 %v1216
        %v1373 = vunpack.c.l.b16 %v1217
        %v1374 = vunpack.c.h.b16 %v1217
        %v1375 = vunpack.c.l.b16 %v1218
        %v1376 = vunpack.c.h.b16 %v1218
        %v1377 = vunpack.c.l.b16 %v1219
        %v1378 = vunpack.c.h.b16 %v1219
        %v1379 = vunpack.c.l.b16 %v1220
        %v1380 = vunpack.c.h.b16 %v1220
        %v1381 = vunpack.c.l.b16 %v1221
        %v1382 = vunpack.c.h.b16 %v1221
        %v1383 = vunpack.c.l.b16 %v1222
        %v1384 = vunpack.c.h.b16 %v1222
        %v1385 = vunpack.c.l.b16 %v1223
        %v1386 = vunpack.c.h.b16 %v1223
        %v1387 = vunpack.c.l.b16 %v1224
        %v1388 = vunpack.c.h.b16 %v1224
        %v1389 = vunpack.c.l.b16 %v1225
        %v1390 = vunpack.c.h.b16 %v1225
        %v1391 = vunpack.c.l.b16 %v1226
        %v1392 = vunpack.c.h.b16 %v1226
        %v1393 = vunpack.c.l.b16 %v1227
        %v1394 = vunpack.c.h.b16 %v1227
        %v1395 = vunpack.c.l.b16 %v1228
        %v1396 = vunpack.c.h.b16 %v1228
        %v1397 = vunpack.c.l.b16 %v1229
        %v1398 = vunpack.c.h.b16 %v1229
        %v1399 = vunpack.c.l.b16 %v1230
        %v1400 = vunpack.c.h.b16 %v1230
        %v1401 = vunpack.c.l.b16 %v1231
        %v1402 = vunpack.c.h.b16 %v1231
        %v1403 = vunpack.c.l.b16 %v1232
        %v1404 = vunpack.c.h.b16 %v1232
        %v1405 = vunpack.c.l.b16 %v1233
        %v1406 = vunpack.c.h.b16 %v1233
        %v1407 = vunpack.c.l.b16 %v1234
        %v1408 = vunpack.c.h.b16 %v1234
        %v1409 = vunpack.c.l.b16 %v1235
        %v1410 = vunpack.c.h.b16 %v1235
        %v1411 = vunpack.c.l.b16 %v1236
        %v1412 = vunpack.c.h.b16 %v1236
        %v1413 = vunpack.c.l.b16 %v1237
        %v1414 = vunpack.c.h.b16 %v1237
        %v1415 = vunpack.c.l.b16 %v1238
        %v1416 = vunpack.c.h.b16 %v1238
        %v1417 = vunpack.c.l.b16 %v1239
        %v1418 = vunpack.c.h.b16 %v1239
        %v1419 = vunpack.c.l.b16 %v1240
        %v1420 = vunpack.c.h.b16 %v1240
        %v1421 = vunpack.c.l.b16 %v1241
        %v1422 = vunpack.c.h.b16 %v1241
        %v1423 = vunpack.c.l.b16 %v1242
        %v1424 = vunpack.c.h.b16 %v1242
        %v1425 = vunpack.c.l.b16 %v1243
        %v1426 = vunpack.c.h.b16 %v1243
        %v1427 = vunpack.c.l.b16 %v1244
        %v1428 = vunpack.c.h.b16 %v1244
        %v1429 = vunpack.c.l.b16 %v1245
        %v1430 = vunpack.c.h.b16 %v1245
        %v1431 = vunpack.c.l.b16 %v1246
        %v1432 = vunpack.c.h.b16 %v1246
        %v1433 = vunpack.c.l.b16 %v1247
        %v1434 = vunpack.c.h.b16 %v1247
        %v1435 = vunpack.c.l.b16 %v1248
        %v1436 = vunpack.c.h.b16 %v1248
        %v1437 = vunpack.c.l.b16 %v1249
        %v1438 = vunpack.c.h.b16 %v1249
        %v1439 = vunpack.c.l.b16 %v1250
        %v1440 = vunpack.c.h.b16 %v1250
        %v1441 = vunpack.c.l.b16 %v1251
        %v1442 = vunpack.c.h.b16 %v1251
        %v1443 = vunpack.c.l.b16 %v1252
        %v1444 = vunpack.c.h.b16 %v1252
        %v1445 = vpack.c.b16 %v1325, %v1317
        %v1446 = vpack.c.b16 %v1326, %v1318
        %v1447 = vpack.c.b16 %v1327, %v1319
        %v1448 = vpack.c.b16 %v1328, %v1320
        %v1449 = vpack.c.b16 %v1329, %v1321
        %v1450 = vpack.c.b16 %v1330, %v1322
        %v1451 = vpack.c.b16 %v1331, %v1323
        %v1452 = vpack.c.b16 %v1332, %v1324
        %v1453 = vpack.c.b16 %v1341, %v1333
        %v1454 = vpack.c.b16 %v1342, %v1334
        %v1455 = vpack.c.b16 %v1343, %v1335
        %v1456 = vpack.c.b16 %v1344, %v1336
        %v1457 = vpack.c.b16 %v1345, %v1337
        %v1458 = vpack.c.b16 %v1346, %v1338
        %v1459 = vpack.c.b16 %v1347, %v1339
        %v1460 = vpack.c.b16 %v1348, %v1340
        %v1461 = vpack.c.b16 %v1357, %v1349
        %v1462 = vpack.c.b16 %v1358, %v1350
        %v1463 = vpack.c.b16 %v1359, %v1351
        %v1464 = vpack.c.b16 %v1360, %v1352
        %v1465 = vpack.c.b16 %v1361, %v1353
        %v1466 = vpack.c.b16 %v1362, %v1354
        %v1467 = vpack.c.b16 %v1363, %v1355
        %v1468 = vpack.c.b16 %v1364, %v1356
        %v1469 = vpack.c.b16 %v1373, %v1365
        %v1470 = vpack.c.b16 %v1374, %v1366
        %v1471 = vpack.c.b16 %v1375, %v1367
        %v1472 = vpack.c.b16 %v1376, %v1368
        %v1473 = vpack.c.b16 %v1377, %v1369
        %v1474 = vpack.c.b16 %v1378, %v1370
        %v1475 = vpack.c.b16 %v1379, %v1371
        %v1476 = vpack.c.b16 %v1380, %v1372
        %v1477 = vpack.c.b16 %v1389, %v1381
        %v1478 = vpack.c.b16 %v1390, %v1382
        %v1479 = vpack.c.b16 %v1391, %v1383
        %v1480 = vpack.c.b16 %v1392, %v1384
        %v1481 = vpack.c.b16 %v1393, %v1385
        %v1482 = vpack.c.b16 %v1394, %v1386
        %v1483 = vpack.c.b16 %v1395, %v1387
        %v1484 = vpack.c.b16 %v1396, %v1388
        %v1485 = vpack.c.b16 %v1405, %v1397
        %v1486 = vpack.c.b16 %v1406, %v1398
        %v1487 = vpack.c.b16 %v1407, %v1399
        %v1488 = vpack.c.b16 %v1408, %v1400
        %v1489 = vpack.c.b16 %v1409, %v1401
        %v1490 = vpack.c.b16 %v1410, %v1402
        %v1491 = vpack.c.b16 %v1411, %v1403
        %v1492 = vpack.c.b16 %v1412, %v1404
        %v1493 = vpack.c.b16 %v1421, %v1413
        %v1494 = vpack.c.b16 %v1422, %v1414
        %v1495 = vpack.c.b16 %v1423, %v1415
        %v1496 = vpack.c.b16 %v1424, %v1416
        %v1497 = vpack.c.b16 %v1425, %v1417
        %v1498 = vpack.c.b16 %v1426, %v1418
        %v1499 = vpack.c.b16 %v1427, %v1419
        %v1500 = vpack.c.b16 %v1428, %v1420
        %v1501 = vpack.c.b16 %v1437, %v1429
        %v1502 = vpack.c.b16 %v1438, %v1430
        %v1503 = vpack.c.b16 %v1439, %v1431
        %v1504 = vpack.c.b16 %v1440, %v1432
        %v1505 = vpack.c.b16 %v1441, %v1433
        %v1506 = vpack.c.b16 %v1442, %v1434
        %v1507 = vpack.c.b16 %v1443, %v1435
        %v1508 = vpack.c.b16 %v1444, %v1436
        %1573 = vmatprep.subr.bf16.mxu0 %v1446
        %1574 = vmatpush1.bf16.msra.mxu0 %v1445
        %1575 = vmatprep.subr.bf16.mxu0 %v1454
        %1576 = vmatpush1.bf16.msra.mxu0 %v1453
        %1577 = vmatprep.subr.bf16.mxu0 %v1462
        %1578 = vmatpush1.bf16.msra.mxu0 %v1461
        %1579 = vmatprep.subr.bf16.mxu0 %v1470
        %1580 = vmatpush1.bf16.msra.mxu0 %v1469
        %1581 = vmatprep.subr.bf16.mxu0 %v1478
        %1582 = vmatpush1.bf16.msra.mxu0 %v1477
        %1583 = vmatprep.subr.bf16.mxu0 %v1486
        %1584 = vmatpush1.bf16.msra.mxu0 %v1485
        %1585 = vmatprep.subr.bf16.mxu0 %v1494
        %1586 = vmatpush1.bf16.msra.mxu0 %v1493
        %1587 = vmatprep.subr.bf16.mxu0 %v1502
        %1588 = vmatpush1.bf16.msra.mxu0 %v1501
        %1589 = vmatprep.subr.bf16.mxu0 0
        %1590 = vmatpush1.bf16.msra.mxu0 0
        %1591 = vmatprep.subr.bf16.mxu0 0
        %1592 = vmatpush1.bf16.msra.mxu0 0
        %1593 = vmatprep.subr.bf16.mxu0 0
        %1594 = vmatpush1.bf16.msra.mxu0 0
        %1595 = vmatprep.subr.bf16.mxu0 0
        %1596 = vmatpush1.bf16.msra.mxu0 0
        %1597 = vmatprep.subr.bf16.mxu0 0
        %1598 = vmatpush1.bf16.msra.mxu0 0
        %1599 = vmatprep.subr.bf16.mxu0 0
        %1600 = vmatpush1.bf16.msra.mxu0 0
        %1601 = vmatprep.subr.bf16.mxu0 0
        %1602 = vmatpush1.bf16.msra.mxu0 0
        %1603 = vmatprep.subr.bf16.mxu0 0
        %1604 = vmatpush1.bf16.msra.mxu0 0
        %1605 = vmatprep.mubr.bf16.mxu0 0
        %1606 = vmatmul.mubr.bf16.gmra.mrb[0].mxu0 %v1188
        %v1607 = vpop.f32.mrb[0].mxu0
        %v1608 = vadd.f32 0.0, %v1607
        %v1609 = vpop.f32.mrb[0].mxu0
        %v1610 = vadd.f32 0.0, %v1609
        %v1611 = vpop.f32.mrb[0].mxu0
        %v1612 = vpop.f32.mrb[0].mxu0
        %1613 = vdwg.mxu0
        %1614 = vmatprep.subr.bf16.mxu0 %v1448
        %1615 = vmatpush1.bf16.msra.mxu0 %v1447
        %1616 = vmatprep.subr.bf16.mxu0 %v1456
        %1617 = vmatpush1.bf16.msra.mxu0 %v1455
        %1618 = vmatprep.subr.bf16.mxu0 %v1464
        %1619 = vmatpush1.bf16.msra.mxu0 %v1463
        %1620 = vmatprep.subr.bf16.mxu0 %v1472
        %1621 = vmatpush1.bf16.msra.mxu0 %v1471
        %1622 = vmatprep.subr.bf16.mxu0 %v1480
        %1623 = vmatpush1.bf16.msra.mxu0 %v1479
        %1624 = vmatprep.subr.bf16.mxu0 %v1488
        %1625 = vmatpush1.bf16.msra.mxu0 %v1487
        %1626 = vmatprep.subr.bf16.mxu0 %v1496
        %1627 = vmatpush1.bf16.msra.mxu0 %v1495
        %1628 = vmatprep.subr.bf16.mxu0 %v1504
        %1629 = vmatpush1.bf16.msra.mxu0 %v1503
        %1630 = vmatprep.subr.bf16.mxu0 0
        %1631 = vmatpush1.bf16.msra.mxu0 0
        %1632 = vmatprep.subr.bf16.mxu0 0
        %1633 = vmatpush1.bf16.msra.mxu0 0
        %1634 = vmatprep.subr.bf16.mxu0 0
        %1635 = vmatpush1.bf16.msra.mxu0 0
        %1636 = vmatprep.subr.bf16.mxu0 0
        %1637 = vmatpush1.bf16.msra.mxu0 0
        %1638 = vmatprep.subr.bf16.mxu0 0
        %1639 = vmatpush1.bf16.msra.mxu0 0
        %1640 = vmatprep.subr.bf16.mxu0 0
        %1641 = vmatpush1.bf16.msra.mxu0 0
        %1642 = vmatprep.subr.bf16.mxu0 0
        %1643 = vmatpush1.bf16.msra.mxu0 0
        %1644 = vmatprep.subr.bf16.mxu0 0
        %1645 = vmatpush1.bf16.msra.mxu0 0
        %1646 = vmatprep.mubr.bf16.mxu0 0
        %1647 = vmatmul.mubr.bf16.gmra.mrb[0].mxu0 %v1188
        %v1648 = vpop.f32.mrb[0].mxu0
        %v1649 = vadd.f32 0.0, %v1648
        %v1650 = vpop.f32.mrb[0].mxu0
        %v1651 = vadd.f32 0.0, %v1650
        %v1652 = vpop.f32.mrb[0].mxu0
        %v1653 = vpop.f32.mrb[0].mxu0
        %1654 = vdwg.mxu0
        %1655 = vmatprep.subr.bf16.mxu0 %v1450
        %1656 = vmatpush1.bf16.msra.mxu0 %v1449
        %1657 = vmatprep.subr.bf16.mxu0 %v1458
        %1658 = vmatpush1.bf16.msra.mxu0 %v1457
        %1659 = vmatprep.subr.bf16.mxu0 %v1466
        %1660 = vmatpush1.bf16.msra.mxu0 %v1465
        %1661 = vmatprep.subr.bf16.mxu0 %v1474
        %1662 = vmatpush1.bf16.msra.mxu0 %v1473
        %1663 = vmatprep.subr.bf16.mxu0 %v1482
        %1664 = vmatpush1.bf16.msra.mxu0 %v1481
        %1665 = vmatprep.subr.bf16.mxu0 %v1490
        %1666 = vmatpush1.bf16.msra.mxu0 %v1489
        %1667 = vmatprep.subr.bf16.mxu0 %v1498
        %1668 = vmatpush1.bf16.msra.mxu0 %v1497
        %1669 = vmatprep.subr.bf16.mxu0 %v1506
        %1670 = vmatpush1.bf16.msra.mxu0 %v1505
        %1671 = vmatprep.subr.bf16.mxu0 0
        %1672 = vmatpush1.bf16.msra.mxu0 0
        %1673 = vmatprep.subr.bf16.mxu0 0
        %1674 = vmatpush1.bf16.msra.mxu0 0
        %1675 = vmatprep.subr.bf16.mxu0 0
        %1676 = vmatpush1.bf16.msra.mxu0 0
        %1677 = vmatprep.subr.bf16.mxu0 0
        %1678 = vmatpush1.bf16.msra.mxu0 0
        %1679 = vmatprep.subr.bf16.mxu0 0
        %1680 = vmatpush1.bf16.msra.mxu0 0
        %1681 = vmatprep.subr.bf16.mxu0 0
        %1682 = vmatpush1.bf16.msra.mxu0 0
        %1683 = vmatprep.subr.bf16.mxu0 0
        %1684 = vmatpush1.bf16.msra.mxu0 0
        %1685 = vmatprep.subr.bf16.mxu0 0
        %1686 = vmatpush1.bf16.msra.mxu0 0
        %1687 = vmatprep.mubr.bf16.mxu0 0
        %1688 = vmatmul.mubr.bf16.gmra.mrb[0].mxu0 %v1188
        %v1689 = vpop.f32.mrb[0].mxu0
        %v1690 = vadd.f32 0.0, %v1689
        %v1691 = vpop.f32.mrb[0].mxu0
        %v1692 = vadd.f32 0.0, %v1691
        %v1693 = vpop.f32.mrb[0].mxu0
        %v1694 = vpop.f32.mrb[0].mxu0
        %1695 = vdwg.mxu0
        %1696 = vmatprep.subr.bf16.mxu0 %v1452
        %1697 = vmatpush1.bf16.msra.mxu0 %v1451
        %1698 = vmatprep.subr.bf16.mxu0 %v1460
        %1699 = vmatpush1.bf16.msra.mxu0 %v1459
        %1700 = vmatprep.subr.bf16.mxu0 %v1468
        %1701 = vmatpush1.bf16.msra.mxu0 %v1467
        %1702 = vmatprep.subr.bf16.mxu0 %v1476
        %1703 = vmatpush1.bf16.msra.mxu0 %v1475
        %1704 = vmatprep.subr.bf16.mxu0 %v1484
        %1705 = vmatpush1.bf16.msra.mxu0 %v1483
        %1706 = vmatprep.subr.bf16.mxu0 %v1492
        %1707 = vmatpush1.bf16.msra.mxu0 %v1491
        %1708 = vmatprep.subr.bf16.mxu0 %v1500
        %1709 = vmatpush1.bf16.msra.mxu0 %v1499
        %1710 = vmatprep.subr.bf16.mxu0 %v1508
        %1711 = vmatpush1.bf16.msra.mxu0 %v1507
        %1712 = vmatprep.subr.bf16.mxu0 0
        %1713 = vmatpush1.bf16.msra.mxu0 0
        %1714 = vmatprep.subr.bf16.mxu0 0
        %1715 = vmatpush1.bf16.msra.mxu0 0
        %1716 = vmatprep.subr.bf16.mxu0 0
        %1717 = vmatpush1.bf16.msra.mxu0 0
        %1718 = vmatprep.subr.bf16.mxu0 0
        %1719 = vmatpush1.bf16.msra.mxu0 0
        %1720 = vmatprep.subr.bf16.mxu0 0
        %1721 = vmatpush1.bf16.msra.mxu0 0
        %1722 = vmatprep.subr.bf16.mxu0 0
        %1723 = vmatpush1.bf16.msra.mxu0 0
        %1724 = vmatprep.subr.bf16.mxu0 0
        %1725 = vmatpush1.bf16.msra.mxu0 0
        %1726 = vmatprep.subr.bf16.mxu0 0
        %1727 = vmatpush1.bf16.msra.mxu0 0
        %1728 = vmatprep.mubr.bf16.mxu0 0
        %1729 = vmatmul.mubr.bf16.gmra.mrb[0].mxu0 %v1188
        %v1730 = vpop.f32.mrb[0].mxu0
        %v1731 = vadd.f32 0.0, %v1730
        %v1732 = vpop.f32.mrb[0].mxu0
        %v1733 = vadd.f32 0.0, %v1732
        %v1734 = vpop.f32.mrb[0].mxu0
        %v1735 = vpop.f32.mrb[0].mxu0
        %1736 = vdwg.mxu0
        %v1737 = vsub.f32 0.0, %v1608
        %v1738 = vsub.f32 0.0, %v1610
        %v1739 = vsub.f32 0.0, %v1649
        %v1740 = vsub.f32 0.0, %v1651
        %v1741 = vmul.f32 %v1737, 1.442695
        %v1742 = vpow.pop %v1741
        %v1743 = vmul.f32 %v1738, 1.442695
        %v1744 = vpow.pop %v1743
        %v1745 = vmul.f32 %v1739, 1.442695
        %v1746 = vpow.pop %v1745
        %v1747 = vmul.f32 %v1740, 1.442695
        %v1748 = vpow.pop %v1747
        %v1749 = vadd.f32 %v1742, 1.0
        %v1750 = vadd.f32 %v1744, 1.0
        %v1751 = vadd.f32 %v1746, 1.0
        %v1752 = vadd.f32 %v1748, 1.0
        %v1753 = vrcp.pop %v1749
        %v1754 = vmul.f32 %v1608, %v1753
        %v1755 = vrcp.pop %v1750
        %v1756 = vmul.f32 %v1610, %v1755
        %v1757 = vrcp.pop %v1751
        %v1758 = vmul.f32 %v1649, %v1757
        %v1759 = vrcp.pop %v1752
        %v1760 = vmul.f32 %v1651, %v1759
        %v1761 = vmul.f32 %v1754, %v1690
        %v1762 = vmul.f32 %v1756, %v1692
        %v1763 = vmul.f32 %v1758, %v1731
        %v1764 = vmul.f32 %v1760, %v1733
        %v1765 = vpack.c.bf16 %v1761, %v1761
        %v1766 = vpack.c.bf16 %v1762, %v1762
        %v1767 = vpack.c.bf16 %v1763, %v1763
        %v1768 = vpack.c.bf16 %v1764, %v1764
        %v1769 = vld [vmem:[#allocation21] sm:$0xf]
        %v1770 = vld [vmem:[#allocation21 + $0x4] sm:$0xf]
        %v1771 = vld [vmem:[#allocation21 + $0x8] sm:$0xf]
        %v1772 = vld [vmem:[#allocation21 + $0xc] sm:$0xf]
        %v1773 = vld [vmem:[#allocation21 + $0x10] sm:$0xf]
        %v1774 = vld [vmem:[#allocation21 + $0x14] sm:$0xf]
        %v1775 = vld [vmem:[#allocation21 + $0x18] sm:$0xf]
        %v1776 = vld [vmem:[#allocation21 + $0x1c] sm:$0xf]
        %v1777 = vld [vmem:[#allocation21 + $0x20] sm:$0xf]
        %v1778 = vld [vmem:[#allocation21 + $0x24] sm:$0xf]
        %v1779 = vld [vmem:[#allocation21 + $0x28] sm:$0xf]
        %v1780 = vld [vmem:[#allocation21 + $0x2c] sm:$0xf]
        %v1781 = vld [vmem:[#allocation21 + $0x30] sm:$0xf]
        %v1782 = vld [vmem:[#allocation21 + $0x34] sm:$0xf]
        %v1783 = vld [vmem:[#allocation21 + $0x38] sm:$0xf]
        %v1784 = vld [vmem:[#allocation21 + $0x3c] sm:$0xf]
        %v1785 = vld [vmem:[#allocation21 + $0x40] sm:$0xf]
        %v1786 = vld [vmem:[#allocation21 + $0x44] sm:$0xf]
        %v1787 = vld [vmem:[#allocation21 + $0x48] sm:$0xf]
        %v1788 = vld [vmem:[#allocation21 + $0x4c] sm:$0xf]
        %v1789 = vld [vmem:[#allocation21 + $0x50] sm:$0xf]
        %v1790 = vld [vmem:[#allocation21 + $0x54] sm:$0xf]
        %v1791 = vld [vmem:[#allocation21 + $0x58] sm:$0xf]
        %v1792 = vld [vmem:[#allocation21 + $0x5c] sm:$0xf]
        %v1793 = vld [vmem:[#allocation21 + $0x60] sm:$0xf]
        %v1794 = vld [vmem:[#allocation21 + $0x64] sm:$0xf]
        %v1795 = vld [vmem:[#allocation21 + $0x68] sm:$0xf]
        %v1796 = vld [vmem:[#allocation21 + $0x6c] sm:$0xf]
        %v1797 = vld [vmem:[#allocation21 + $0x70] sm:$0xf]
        %v1798 = vld [vmem:[#allocation21 + $0x74] sm:$0xf]
        %v1799 = vld [vmem:[#allocation21 + $0x78] sm:$0xf]
        %v1800 = vld [vmem:[#allocation21 + $0x7c] sm:$0xf]
        %v1801 = vld [vmem:[#allocation21 + $0x80] sm:$0xf]
        %v1802 = vld [vmem:[#allocation21 + $0x84] sm:$0xf]
        %v1803 = vld [vmem:[#allocation21 + $0x88] sm:$0xf]
        %v1804 = vld [vmem:[#allocation21 + $0x8c] sm:$0xf]
        %v1805 = vld [vmem:[#allocation21 + $0x90] sm:$0xf]
        %v1806 = vld [vmem:[#allocation21 + $0x94] sm:$0xf]
        %v1807 = vld [vmem:[#allocation21 + $0x98] sm:$0xf]
        %v1808 = vld [vmem:[#allocation21 + $0x9c] sm:$0xf]
        %v1809 = vld [vmem:[#allocation21 + $0xa0] sm:$0xf]
        %v1810 = vld [vmem:[#allocation21 + $0xa4] sm:$0xf]
        %v1811 = vld [vmem:[#allocation21 + $0xa8] sm:$0xf]
        %v1812 = vld [vmem:[#allocation21 + $0xac] sm:$0xf]
        %v1813 = vld [vmem:[#allocation21 + $0xb0] sm:$0xf]
        %v1814 = vld [vmem:[#allocation21 + $0xb4] sm:$0xf]
        %v1815 = vld [vmem:[#allocation21 + $0xb8] sm:$0xf]
        %v1816 = vld [vmem:[#allocation21 + $0xbc] sm:$0xf]
        %v1817 = vld [vmem:[#allocation21 + $0xc0] sm:$0xf]
        %v1818 = vld [vmem:[#allocation21 + $0xc4] sm:$0xf]
        %v1819 = vld [vmem:[#allocation21 + $0xc8] sm:$0xf]
        %v1820 = vld [vmem:[#allocation21 + $0xcc] sm:$0xf]
        %v1821 = vld [vmem:[#allocation21 + $0xd0] sm:$0xf]
        %v1822 = vld [vmem:[#allocation21 + $0xd4] sm:$0xf]
        %v1823 = vld [vmem:[#allocation21 + $0xd8] sm:$0xf]
        %v1824 = vld [vmem:[#allocation21 + $0xdc] sm:$0xf]
        %v1825 = vld [vmem:[#allocation21 + $0xe0] sm:$0xf]
        %v1826 = vld [vmem:[#allocation21 + $0xe4] sm:$0xf]
        %v1827 = vld [vmem:[#allocation21 + $0xe8] sm:$0xf]
        %v1828 = vld [vmem:[#allocation21 + $0xec] sm:$0xf]
        %v1829 = vld [vmem:[#allocation21 + $0xf0] sm:$0xf]
        %v1830 = vld [vmem:[#allocation21 + $0xf4] sm:$0xf]
        %v1831 = vld [vmem:[#allocation21 + $0xf8] sm:$0xf]
        %v1832 = vld [vmem:[#allocation21 + $0xfc] sm:$0xf]
        %v1897 = vunpack.c.l.b16 %v1769
        %v1898 = vunpack.c.l.b16 %v1770
        %v1899 = vunpack.c.l.b16 %v1771
        %v1900 = vunpack.c.l.b16 %v1772
        %v1901 = vunpack.c.l.b16 %v1773
        %v1902 = vunpack.c.l.b16 %v1774
        %v1903 = vunpack.c.l.b16 %v1775
        %v1904 = vunpack.c.l.b16 %v1776
        %v1905 = vunpack.c.l.b16 %v1777
        %v1906 = vunpack.c.l.b16 %v1778
        %v1907 = vunpack.c.l.b16 %v1779
        %v1908 = vunpack.c.l.b16 %v1780
        %v1909 = vunpack.c.l.b16 %v1781
        %v1910 = vunpack.c.l.b16 %v1782
        %v1911 = vunpack.c.l.b16 %v1783
        %v1912 = vunpack.c.l.b16 %v1784
        %v1913 = vunpack.c.l.b16 %v1785
        %v1914 = vunpack.c.l.b16 %v1786
        %v1915 = vunpack.c.l.b16 %v1787
        %v1916 = vunpack.c.l.b16 %v1788
        %v1917 = vunpack.c.l.b16 %v1789
        %v1918 = vunpack.c.l.b16 %v1790
        %v1919 = vunpack.c.l.b16 %v1791
        %v1920 = vunpack.c.l.b16 %v1792
        %v1921 = vunpack.c.l.b16 %v1793
        %v1922 = vunpack.c.l.b16 %v1794
        %v1923 = vunpack.c.l.b16 %v1795
        %v1924 = vunpack.c.l.b16 %v1796
        %v1925 = vunpack.c.l.b16 %v1797
        %v1926 = vunpack.c.l.b16 %v1798
        %v1927 = vunpack.c.l.b16 %v1799
        %v1928 = vunpack.c.l.b16 %v1800
        %v1929 = vunpack.c.l.b16 %v1801
        %v1930 = vunpack.c.l.b16 %v1802
        %v1931 = vunpack.c.l.b16 %v1803
        %v1932 = vunpack.c.l.b16 %v1804
        %v1933 = vunpack.c.l.b16 %v1805
        %v1934 = vunpack.c.l.b16 %v1806
        %v1935 = vunpack.c.l.b16 %v1807
        %v1936 = vunpack.c.l.b16 %v1808
        %v1937 = vunpack.c.l.b16 %v1809
        %v1938 = vunpack.c.l.b16 %v1810
        %v1939 = vunpack.c.l.b16 %v1811
        %v1940 = vunpack.c.l.b16 %v1812
        %v1941 = vunpack.c.l.b16 %v1813
        %v1942 = vunpack.c.l.b16 %v1814
        %v1943 = vunpack.c.l.b16 %v1815
        %v1944 = vunpack.c.l.b16 %v1816
        %v1945 = vunpack.c.l.b16 %v1817
        %v1946 = vunpack.c.l.b16 %v1818
        %v1947 = vunpack.c.l.b16 %v1819
        %v1948 = vunpack.c.l.b16 %v1820
        %v1949 = vunpack.c.l.b16 %v1821
        %v1950 = vunpack.c.l.b16 %v1822
        %v1951 = vunpack.c.l.b16 %v1823
        %v1952 = vunpack.c.l.b16 %v1824
        %v1953 = vunpack.c.l.b16 %v1825
        %v1954 = vunpack.c.l.b16 %v1826
        %v1955 = vunpack.c.l.b16 %v1827
        %v1956 = vunpack.c.l.b16 %v1828
        %v1957 = vunpack.c.l.b16 %v1829
        %v1958 = vunpack.c.l.b16 %v1830
        %v1959 = vunpack.c.l.b16 %v1831
        %v1960 = vunpack.c.l.b16 %v1832
        %v1961 = vpack.c.b16 %v1898, %v1897
        %v1962 = vpack.c.b16 %v1900, %v1899
        %v1963 = vpack.c.b16 %v1902, %v1901
        %v1964 = vpack.c.b16 %v1904, %v1903
        %v1965 = vpack.c.b16 %v1906, %v1905
        %v1966 = vpack.c.b16 %v1908, %v1907
        %v1967 = vpack.c.b16 %v1910, %v1909
        %v1968 = vpack.c.b16 %v1912, %v1911
        %v1969 = vpack.c.b16 %v1914, %v1913
        %v1970 = vpack.c.b16 %v1916, %v1915
        %v1971 = vpack.c.b16 %v1918, %v1917
        %v1972 = vpack.c.b16 %v1920, %v1919
        %v1973 = vpack.c.b16 %v1922, %v1921
        %v1974 = vpack.c.b16 %v1924, %v1923
        %v1975 = vpack.c.b16 %v1926, %v1925
        %v1976 = vpack.c.b16 %v1928, %v1927
        %v1977 = vpack.c.b16 %v1930, %v1929
        %v1978 = vpack.c.b16 %v1932, %v1931
        %v1979 = vpack.c.b16 %v1934, %v1933
        %v1980 = vpack.c.b16 %v1936, %v1935
        %v1981 = vpack.c.b16 %v1938, %v1937
        %v1982 = vpack.c.b16 %v1940, %v1939
        %v1983 = vpack.c.b16 %v1942, %v1941
        %v1984 = vpack.c.b16 %v1944, %v1943
        %v1985 = vpack.c.b16 %v1946, %v1945
        %v1986 = vpack.c.b16 %v1948, %v1947
        %v1987 = vpack.c.b16 %v1950, %v1949
        %v1988 = vpack.c.b16 %v1952, %v1951
        %v1989 = vpack.c.b16 %v1954, %v1953
        %v1990 = vpack.c.b16 %v1956, %v1955
        %v1991 = vpack.c.b16 %v1958, %v1957
        %v1992 = vpack.c.b16 %v1960, %v1959
        %2025 = vmatprep.subr.bf16.mxu0 0
        %2026 = vmatpush1.bf16.msra.mxu0 %v1961
        %2027 = vmatprep.subr.bf16.mxu0 0
        %2028 = vmatpush1.bf16.msra.mxu0 %v1962
        %2029 = vmatprep.subr.bf16.mxu0 0
        %2030 = vmatpush1.bf16.msra.mxu0 %v1963
        %2031 = vmatprep.subr.bf16.mxu0 0
        %2032 = vmatpush1.bf16.msra.mxu0 %v1964
        %2033 = vmatprep.subr.bf16.mxu0 0
        %2034 = vmatpush1.bf16.msra.mxu0 %v1965
        %2035 = vmatprep.subr.bf16.mxu0 0
        %2036 = vmatpush1.bf16.msra.mxu0 %v1966
        %2037 = vmatprep.subr.bf16.mxu0 0
        %2038 = vmatpush1.bf16.msra.mxu0 %v1967
        %2039 = vmatprep.subr.bf16.mxu0 0
        %2040 = vmatpush1.bf16.msra.mxu0 %v1968
        %2041 = vmatprep.subr.bf16.mxu0 0
        %2042 = vmatpush1.bf16.msra.mxu0 %v1969
        %2043 = vmatprep.subr.bf16.mxu0 0
        %2044 = vmatpush1.bf16.msra.mxu0 %v1970
        %2045 = vmatprep.subr.bf16.mxu0 0
        %2046 = vmatpush1.bf16.msra.mxu0 %v1971
        %2047 = vmatprep.subr.bf16.mxu0 0
        %2048 = vmatpush1.bf16.msra.mxu0 %v1972
        %2049 = vmatprep.subr.bf16.mxu0 0
        %2050 = vmatpush1.bf16.msra.mxu0 %v1973
        %2051 = vmatprep.subr.bf16.mxu0 0
        %2052 = vmatpush1.bf16.msra.mxu0 %v1974
        %2053 = vmatprep.subr.bf16.mxu0 0
        %2054 = vmatpush1.bf16.msra.mxu0 %v1975
        %2055 = vmatprep.subr.bf16.mxu0 0
        %2056 = vmatpush1.bf16.msra.mxu0 %v1976
        %2057 = vmatprep.mubr.bf16.mxu0 %v1766
        %2058 = vmatmul.mubr.bf16.gmra.mrb[0].mxu0 %v1765
        %v2059 = vpop.f32.mrb[0].mxu0
        %v2060 = vadd.f32 0.0, %v2059
        %v2061 = vpop.f32.mrb[0].mxu0
        %v2062 = vpop.f32.mrb[0].mxu0
        %v2063 = vpop.f32.mrb[0].mxu0
        %2064 = vdwg.mxu0
        %2065 = vmatprep.subr.bf16.mxu0 0
        %2066 = vmatpush1.bf16.msra.mxu0 %v1977
        %2067 = vmatprep.subr.bf16.mxu0 0
        %2068 = vmatpush1.bf16.msra.mxu0 %v1978
        %2069 = vmatprep.subr.bf16.mxu0 0
        %2070 = vmatpush1.bf16.msra.mxu0 %v1979
        %2071 = vmatprep.subr.bf16.mxu0 0
        %2072 = vmatpush1.bf16.msra.mxu0 %v1980
        %2073 = vmatprep.subr.bf16.mxu0 0
        %2074 = vmatpush1.bf16.msra.mxu0 %v1981
        %2075 = vmatprep.subr.bf16.mxu0 0
        %2076 = vmatpush1.bf16.msra.mxu0 %v1982
        %2077 = vmatprep.subr.bf16.mxu0 0
        %2078 = vmatpush1.bf16.msra.mxu0 %v1983
        %2079 = vmatprep.subr.bf16.mxu0 0
        %2080 = vmatpush1.bf16.msra.mxu0 %v1984
        %2081 = vmatprep.subr.bf16.mxu0 0
        %2082 = vmatpush1.bf16.msra.mxu0 %v1985
        %2083 = vmatprep.subr.bf16.mxu0 0
        %2084 = vmatpush1.bf16.msra.mxu0 %v1986
        %2085 = vmatprep.subr.bf16.mxu0 0
        %2086 = vmatpush1.bf16.msra.mxu0 %v1987
        %2087 = vmatprep.subr.bf16.mxu0 0
        %2088 = vmatpush1.bf16.msra.mxu0 %v1988
        %2089 = vmatprep.subr.bf16.mxu0 0
        %2090 = vmatpush1.bf16.msra.mxu0 %v1989
        %2091 = vmatprep.subr.bf16.mxu0 0
        %2092 = vmatpush1.bf16.msra.mxu0 %v1990
        %2093 = vmatprep.subr.bf16.mxu0 0
        %2094 = vmatpush1.bf16.msra.mxu0 %v1991
        %2095 = vmatprep.subr.bf16.mxu0 0
        %2096 = vmatpush1.bf16.msra.mxu0 %v1992
        %2097 = vmatprep.mubr.bf16.mxu0 %v1768
        %2098 = vmatmul.mubr.bf16.gmra.mrb[0].mxu0 %v1767
        %v2099 = vpop.f32.mrb[0].mxu0
        %v2100 = vadd.f32 %v2060, %v2099
        %v2101 = vpop.f32.mrb[0].mxu0
        %v2102 = vpop.f32.mrb[0].mxu0
        %v2103 = vpop.f32.mrb[0].mxu0
        %2104 = vdwg.mxu0
        %v2105 = vadd.f32 %v1172, %v2100
        %v2106 = vpack.c.bf16 %v2105, %v2105
        %2107 = vst [vmem:[%s516] sm:$0xf] %v2106
        %s2108 = sand.u32 %s262, 1
        %s2109 = scalar_lea.sflag [#allocation8], %s2108
        %s2110 = sand.u32 %s262, 1
        %s2111 = smul.addr %s2110, 4
        %s2112 = scalar_lea.vmem [#allocation23], %s2111
        // Predicated region
        $region108: #{tpu_custom_call.1} parent=59 // pred_check
          %p2113 = pneg %p272
        $region109: #{tpu_custom_call.1} parent=59 // pred_check_branch
          %2115 = sbr.rel (%p2113) target = $region111
        $region110: #{tpu_custom_call.1} parent=59 // pred_region
          %s2117 = ssub.s32 64, 64
          %2118 = vsyncadd %s2109, %s2117
          %s2119 = smul.addr %s34, 64
          %s2120 = scalar_lea.hbm %s10, %s2119
          %s2122 = sshll.u32 %s2112, 4
          %s2123 = int_to_ptr.vmem [resolvable:$true] %s2122
          %2125 = dma.vmem_to_hbm [thread:$0]  %s2123, 64, %s2120, %s2109
        $region111: #{tpu_custom_call.1} parent=59 // pred_fallthru
          _
      $region60: #{tpu_custom_call.1} parent=5 // pred_fallthru
        _
      %p2126 = scmp.le.s32.totalorder 2, %s29
      // Predicated region
      $region112: #{tpu_custom_call.1} parent=5 // pred_check
        %p2127 = pneg %p2126
      $region113: #{tpu_custom_call.1} parent=5 // pred_check_branch
        %2129 = sbr.rel (%p2127) target = $region115
      $region114: #{tpu_custom_call.1} parent=5 // pred_region
        %s2130 = ssub.s32 %s29, 2
        // Predicated region
        $region116: #{tpu_custom_call.1} parent=114 // pred_check
          %p2131 = pneg %p278
        $region117: #{tpu_custom_call.1} parent=114 // pred_check_branch
          %2133 = sbr.rel (%p2131) target = $region119
        $region118: #{tpu_custom_call.1} parent=114 // pred_region
          %s2134 = sand.u32 %s263, 1
          %s2135 = scalar_lea.sflag [#allocation8], %s2134
          %s2136 = sand.u32 %s263, 1
          %s2137 = smul.addr %s2136, 4
          %s2138 = scalar_lea.vmem [#allocation23], %s2137
          %2139 = dma.done %s2135, 64
        $region119: #{tpu_custom_call.1} parent=114 // pred_fallthru
          _
      $region115: #{tpu_custom_call.1} parent=5 // pred_fallthru
        _
    $region6: #{tpu_custom_call.1} parent=1 // loop_footer
      %s33 = sadd.s32 1, %s29
    $region7: #{tpu_custom_call.1} parent=1 // loop_footer_branch
      %28 = sbr.rel target = $region3
    $region8: #{tpu_custom_call.1} parent=1 // loop_exit
      _
    %2140 = vsyncpa [#allocation7], 1
    %s2141 = scalar_lea.sflag [#allocation7], 1
    %2142 = vsyncpa %s2141, 1
    %2143 = vsyncpa [#allocation10], 1
    %s2144 = scalar_lea.sflag [#allocation10], 1
    %2145 = vsyncpa %s2144, 1
    %2146 = vsyncpa [#allocation13], 1
    %2147 = vsyncpa [#allocation16], 1
    %2148 = vsyncpa [#allocation19], 1
    %2149 = vsyncpa [#allocation22], 1
    %2150 = vsyncpa [#allocation8], 1
    %s2151 = scalar_lea.sflag [#allocation8], 1
    %2152 = vsyncpa %s2151, 1

</llo_original>
